<compile_context>
chip_gen: v7x
topology: tpu7x:2x2x1
jax: 0.10.0
libtpu: 0.0.40
codegen_flags: <defaults>
</compile_context>

<pallas_src>
import jax
import jax.numpy as jnp
import numpy as np
from jax import lax
from jax.experimental import pallas as pl
from jax.experimental.pallas import tpu as pltpu


def _edge_loss_kernel(i_tbl_ref, j_tbl_ref, w_tbl_ref,
                      pred_r_ref, gt_r_ref, pred_c_ref, gt_c_ref,
                      mask_r_ref, mask_ct_ref,
                      loss_out_ref, valid_out_ref):
    p = pl.program_id(0)            # pair of row blocks {p, g-1-p}  (parallel)
    q = pl.program_id(1)            # step within the pair           (arbitrary)
    inner = pl.num_programs(1)

    # Output block (p, 0) stays resident across all q -> init once, accumulate.
    @pl.when(q == 0)
    def _():
        loss_out_ref[...] = jnp.zeros_like(loss_out_ref)
        valid_out_ref[...] = jnp.zeros_like(valid_out_ref)

    w = w_tbl_ref[p * inner + q]    # 0 = padded step, 1 = diagonal, 2 = off-diag

    @pl.when(w > 0)
    def _():
        pred_r = pred_r_ref[...]    # (tq, D) f32 rows
        gt_r = gt_r_ref[...]        # (tq, D) f32 rows
        pred_c = pred_c_ref[...]    # (D, tk) f32, pre-transposed in wrapper
        gt_c = gt_c_ref[...]        # (D, tk) f32

        tq, d_dim = pred_r.shape
        tk = pred_c.shape[1]

        # Fused signed accumulator: s = pred_pd - gt_pd (one running tile).
        s = (jnp.abs(pred_r[:, 0:1] - pred_c[0:1, :])
             - jnp.abs(gt_r[:, 0:1] - gt_c[0:1, :]))
        for d in range(1, d_dim):   # D tiny & static -> fully unrolled
            s = s + (jnp.abs(pred_r[:, d:d + 1] - pred_c[d:d + 1, :])
                     - jnp.abs(gt_r[:, d:d + 1] - gt_c[d:d + 1, :]))
        diff = jnp.abs(s)           # |pred_pd - gt_pd|

        # plane_pair_mask tile = mask_rows @ mask_cols (RHS already transposed
        # in wrapper -> plain MXU matmul; bf16 exact for 0/1 mask, f32 acc).
        plane = lax.dot_general(
            mask_r_ref[...], mask_ct_ref[...],
            dimension_numbers=(((1,), (0,)), ((), ())),
            preferred_element_type=jnp.float32)

        # Fused threshold mask.
        contrib = jnp.where(diff < 3.0, plane, 0.0)
        loss_w = contrib * diff

        # Layout-preserving partial reduction to (8, 128): fold lanes with
        # 128-aligned slices, then fold sublanes via the canonical
        # (tq//8, 8, 128) vreg-tile view.  Pure VALU vreg adds, no XLU.
        def fold_to_8x128(x):
            acc = x[:, 0:128]
            for c in range(1, tk // 128):
                acc = acc + x[:, c * 128:(c + 1) * 128]
            return acc.reshape(tq // 8, 8, 128).sum(axis=0)

        wf = w.astype(jnp.float32)
        loss_out_ref[...] += wf * fold_to_8x128(loss_w)
        valid_out_ref[...] += wf * fold_to_8x128(contrib)


def _build_pair_tables(g):
    """Map a balanced (n_pairs, g+1) grid onto the lower triangle of the
    (g, g) tile grid.  Pair p owns row blocks p and g-1-p; each pair has
    exactly g+1 valid steps (even g) so the parallel axis is load-balanced."""
    n_pairs = (g + 1) // 2
    inner = g + 1
    i_tbl = np.zeros((n_pairs * inner,), np.int32)
    j_tbl = np.zeros((n_pairs * inner,), np.int32)
    w_tbl = np.zeros((n_pairs * inner,), np.int32)
    for p in range(n_pairs):
        r_lo, r_hi = p, g - 1 - p
        entries = [(r_lo, j, 2 if j < r_lo else 1) for j in range(r_lo + 1)]
        if r_hi != r_lo:
            entries += [(r_hi, j, 2 if j < r_hi else 1) for j in range(r_hi + 1)]
        for off, (ii, jj, ww) in enumerate(entries):
            t = p * inner + off
            i_tbl[t], j_tbl[t], w_tbl[t] = ii, jj, ww
    return n_pairs, inner, i_tbl, j_tbl, w_tbl


def edge_loss(pred_point, gt_point, mask):
    """Returns (loss, valid_coord) float32 scalars, matching EdgeLoss.forward."""
    n, d_dim = pred_point.shape
    m = mask.shape[1]

    # Lane-dense padding of the point axis; padded mask rows are zero so the
    # padded pairs contribute 0 to both loss and valid.
    n_pad = ((n + 127) // 128) * 128
    pad = n_pad - n
    pred_p = jnp.pad(pred_point.astype(jnp.float32), ((0, pad), (0, 0)))
    gt_p = jnp.pad(gt_point.astype(jnp.float32), ((0, pad), (0, 0)))
    mask_p = jnp.pad(mask.astype(jnp.float32), ((0, pad), (0, 0)))

    pred_t = pred_p.T                         # (D, n_pad): no in-kernel transposes
    gt_t = gt_p.T
    mask_r = mask_p.astype(jnp.bfloat16)      # (n_pad, M), exact for 0/1
    mask_ct = mask_r.T                        # (M, n_pad): plain MXU RHS

    # tile=256 bounds vreg/spill pressure (review); fall back to 128.
    tile = 128
    for cand in (256, 128):
        if n_pad % cand == 0:
            tile = cand
            break
    g = n_pad // tile

    n_pairs, inner, i_np, j_np, w_np = _build_pair_tables(g)
    i_tbl = jnp.asarray(i_np)
    j_tbl = jnp.asarray(j_np)
    w_tbl = jnp.asarray(w_np)

    flops = int((6 * d_dim + 8 + 2 * m) * n_pad * n_pad)
    bytes_accessed = int(4 * 4 * n_pad * d_dim + 2 * 2 * n_pad * m
                         + 4 * 2 * n_pairs * 8 * 128)

    row_spec = pl.BlockSpec(
        (tile, d_dim), lambda p, q, it, jt, wt: (it[p * inner + q], 0))
    col_spec = pl.BlockSpec(
        (d_dim, tile), lambda p, q, it, jt, wt: (0, jt[p * inner + q]))
    mask_row_spec = pl.BlockSpec(
        (tile, m), lambda p, q, it, jt, wt: (it[p * inner + q], 0))
    mask_col_spec = pl.BlockSpec(
        (m, tile), lambda p, q, it, jt, wt: (0, jt[p * inner + q]))
    out_spec = pl.BlockSpec((8, 128), lambda p, q, it, jt, wt: (p, 0))

    loss_part, valid_part = pl.pallas_call(
        _edge_loss_kernel,
        out_shape=(
            jax.ShapeDtypeStruct((n_pairs * 8, 128), jnp.float32),
            jax.ShapeDtypeStruct((n_pairs * 8, 128), jnp.float32),
        ),
        grid_spec=pltpu.PrefetchScalarGridSpec(
            num_scalar_prefetch=3,
            grid=(n_pairs, inner),
            in_specs=[
                row_spec,        # pred rows
                row_spec,        # gt rows
                col_spec,        # pred cols (pre-transposed)
                col_spec,        # gt cols (pre-transposed)
                mask_row_spec,   # mask rows (tile, M) bf16
                mask_col_spec,   # mask cols^T (M, tile) bf16
            ],
            out_specs=(out_spec, out_spec),
        ),
        compiler_params=pltpu.CompilerParams(
            dimension_semantics=("parallel", "arbitrary"),
            vmem_limit_bytes=32 * 1024 * 1024,
        ),
        cost_estimate=pl.CostEstimate(
            flops=flops, transcendentals=0, bytes_accessed=bytes_accessed),
    )(i_tbl, j_tbl, w_tbl, pred_p, gt_p, pred_t, gt_t, mask_r, mask_ct)

    # Per-pair (8, 128) partial tiles; grand total in the wrapper.
    return jnp.sum(loss_part), jnp.sum(valid_part)


def edge_loss_ref(pred_point, gt_point, mask):
    """Pure-JAX reference mirroring the PyTorch forward."""
    pred_pd = jnp.sum(jnp.abs(pred_point[:, None, :] - pred_point[None, :, :]), axis=-1)
    gt_pd = jnp.sum(jnp.abs(gt_point[:, None, :] - gt_point[None, :, :]), axis=-1)
    plane_pair_mask = mask @ mask.T
    distance_pair_mask = (jnp.abs(gt_pd - pred_pd) < 3).astype(jnp.float32)
    pair_mask = plane_pair_mask * distance_pair_mask
    loss = jnp.sum(pair_mask * jnp.abs(pred_pd - gt_pd))
    valid = jnp.sum(pair_mask)
    return loss, valid


if __name__ == "__main__":
    key = jax.random.PRNGKey(0)

    # Case 1: N=64 -> single 128 tile (g=1), exercises the odd-g padded step.
    # Case 2: N=300 -> padded to 384, g=3, 2 balanced pairs, exercises the
    # triangular pair-table mapping, off-diagonal doubling and partial outputs.
    for (N, D, M) in [(64, 3, 8), (300, 3, 8)]:
        key, k1, k2, k3 = jax.random.split(key, 4)
        pred_point = jax.random.normal(k1, (N, D), dtype=jnp.float32)
        gt_point = pred_point + 0.5 * jax.random.normal(k2, (N, D), dtype=jnp.float32)
        mask = (jax.random.uniform(k3, (N, M)) > 0.5).astype(jnp.float32)

        loss, valid = jax.block_until_ready(edge_loss(pred_point, gt_point, mask))
        loss_r, valid_r = edge_loss_ref(pred_point, gt_point, mask)

        assert jnp.allclose(loss, loss_r, rtol=1e-4, atol=1e-2), (N, loss, loss_r)
        assert jnp.allclose(valid, valid_r, rtol=1e-4, atol=1e-2), (N, valid, valid_r)

    print("KERNEL_OK")
</pallas_src>

<mosaic_0001>
module attributes {stable_mosaic.version = 11 : i64} {
  func.func @_edge_loss_kernel(%arg0: i32, %arg1: i32, %arg2: memref<2xi32, #tpu.memory_space<smem>>, %arg3: memref<2xi32, #tpu.memory_space<smem>>, %arg4: memref<2xi32, #tpu.memory_space<smem>>, %arg5: memref<128x3xf32, #tpu.memory_space<vmem>>, %arg6: memref<128x3xf32, #tpu.memory_space<vmem>>, %arg7: memref<3x128xf32, #tpu.memory_space<vmem>>, %arg8: memref<3x128xf32, #tpu.memory_space<vmem>>, %arg9: memref<128x8xbf16, #tpu.memory_space<vmem>>, %arg10: memref<8x128xbf16, #tpu.memory_space<vmem>>, %arg11: memref<8x128xf32, #tpu.memory_space<vmem>>, %arg12: memref<8x128xf32, #tpu.memory_space<vmem>>) attributes {dimension_semantics = [#tpu.dimension_semantics<parallel>, #tpu.dimension_semantics<arbitrary>], iteration_bounds = array<i64: 1, 2>, scalar_prefetch = 3 : i64, scratch_operands = 0 : i64, tpu.core_type = #tpu.core_type<tc>, window_params = [{transform_indices = @transform_0, window_bounds = array<i64: 128, 3>}, {transform_indices = @transform_1, window_bounds = array<i64: 128, 3>}, {transform_indices = @transform_2, window_bounds = array<i64: 3, 128>}, {transform_indices = @transform_3, window_bounds = array<i64: 3, 128>}, {transform_indices = @transform_4, window_bounds = array<i64: 128, 8>}, {transform_indices = @transform_5, window_bounds = array<i64: 8, 128>}, {transform_indices = @transform_6, window_bounds = array<i64: 8, 128>}, {transform_indices = @transform_7, window_bounds = array<i64: 8, 128>}]} {
    %c0_i32 = arith.constant 0 : i32
    %0 = arith.cmpi eq, %arg1, %c0_i32 : i32
    %1 = arith.extui %0 : i1 to i32
    %c0_i32_0 = arith.constant 0 : i32
    %2 = arith.cmpi ne, %1, %c0_i32_0 : i32
    scf.if %2 {
      %cst = arith.constant 0.000000e+00 : f32
      %10 = vector.broadcast %cst : f32 to vector<8x128xf32>
      %c0 = arith.constant 0 : index
      %c0_3 = arith.constant 0 : index
      %11 = vector.load %arg11[%c0, %c0_3] : memref<8x128xf32, #tpu.memory_space<vmem>>, vector<8x128xf32>
      tpu.vector_store %arg11[%c0, %c0_3], %10 {strides = array<i32>} : memref<8x128xf32, #tpu.memory_space<vmem>>, vector<8x128xf32>,
      %cst_4 = arith.constant 0.000000e+00 : f32
      %12 = vector.broadcast %cst_4 : f32 to vector<8x128xf32>
      %c0_5 = arith.constant 0 : index
      %c0_6 = arith.constant 0 : index
      %13 = vector.load %arg12[%c0_5, %c0_6] : memref<8x128xf32, #tpu.memory_space<vmem>>, vector<8x128xf32>
      tpu.vector_store %arg12[%c0_5, %c0_6], %12 {strides = array<i32>} : memref<8x128xf32, #tpu.memory_space<vmem>>, vector<8x128xf32>,
    } else {
    }
    %c2_i32 = arith.constant 2 : i32
    %3 = arith.muli %arg0, %c2_i32 : i32
    %4 = arith.addi %3, %arg1 : i32
    %5 = arith.index_cast %4 : i32 to index
    %6 = memref.load %arg4[%5] : memref<2xi32, #tpu.memory_space<smem>>
    %c0_i32_1 = arith.constant 0 : i32
    %7 = arith.cmpi sgt, %6, %c0_i32_1 : i32
    %8 = arith.extui %7 : i1 to i32
    %c0_i32_2 = arith.constant 0 : i32
    %9 = arith.cmpi ne, %8, %c0_i32_2 : i32
    scf.if %9 {
      %c0 = arith.constant 0 : index
      %c0_3 = arith.constant 0 : index
      %10 = vector.load %arg5[%c0, %c0_3] : memref<128x3xf32, #tpu.memory_space<vmem>>, vector<128x3xf32>
      %c0_4 = arith.constant 0 : index
      %c0_5 = arith.constant 0 : index
      %11 = vector.load %arg6[%c0_4, %c0_5] : memref<128x3xf32, #tpu.memory_space<vmem>>, vector<128x3xf32>
      %c0_6 = arith.constant 0 : index
      %c0_7 = arith.constant 0 : index
      %12 = vector.load %arg7[%c0_6, %c0_7] : memref<3x128xf32, #tpu.memory_space<vmem>>, vector<3x128xf32>
      %c0_8 = arith.constant 0 : index
      %c0_9 = arith.constant 0 : index
      %13 = vector.load %arg8[%c0_8, %c0_9] : memref<3x128xf32, #tpu.memory_space<vmem>>, vector<3x128xf32>
      %14 = vector.extract_strided_slice %10 {offsets = [0, 0], sizes = [128, 1], strides = [1, 1]} : vector<128x3xf32> to vector<128x1xf32>
      %15 = vector.extract_strided_slice %12 {offsets = [0, 0], sizes = [1, 128], strides = [1, 1]} : vector<3x128xf32> to vector<1x128xf32>
      %16 = vector.broadcast %14 : vector<128x1xf32> to vector<128x128xf32>
      %17 = vector.broadcast %15 : vector<1x128xf32> to vector<128x128xf32>
      %18 = arith.subf %16, %17 : vector<128x128xf32>
      %19 = math.absf %18 : vector<128x128xf32>
      %20 = vector.extract_strided_slice %11 {offsets = [0, 0], sizes = [128, 1], strides = [1, 1]} : vector<128x3xf32> to vector<128x1xf32>
      %21 = vector.extract_strided_slice %13 {offsets = [0, 0], sizes = [1, 128], strides = [1, 1]} : vector<3x128xf32> to vector<1x128xf32>
      %22 = vector.broadcast %20 : vector<128x1xf32> to vector<128x128xf32>
      %23 = vector.broadcast %21 : vector<1x128xf32> to vector<128x128xf32>
      %24 = arith.subf %22, %23 : vector<128x128xf32>
      %25 = math.absf %24 : vector<128x128xf32>
      %26 = arith.subf %19, %25 : vector<128x128xf32>
      %27 = vector.extract_strided_slice %10 {offsets = [0, 1], sizes = [128, 1], strides = [1, 1]} : vector<128x3xf32> to vector<128x1xf32>
      %28 = vector.extract_strided_slice %12 {offsets = [1, 0], sizes = [1, 128], strides = [1, 1]} : vector<3x128xf32> to vector<1x128xf32>
      %29 = vector.broadcast %27 : vector<128x1xf32> to vector<128x128xf32>
      %30 = vector.broadcast %28 : vector<1x128xf32> to vector<128x128xf32>
      %31 = arith.subf %29, %30 : vector<128x128xf32>
      %32 = math.absf %31 : vector<128x128xf32>
      %33 = vector.extract_strided_slice %11 {offsets = [0, 1], sizes = [128, 1], strides = [1, 1]} : vector<128x3xf32> to vector<128x1xf32>
      %34 = vector.extract_strided_slice %13 {offsets = [1, 0], sizes = [1, 128], strides = [1, 1]} : vector<3x128xf32> to vector<1x128xf32>
      %35 = vector.broadcast %33 : vector<128x1xf32> to vector<128x128xf32>
      %36 = vector.broadcast %34 : vector<1x128xf32> to vector<128x128xf32>
      %37 = arith.subf %35, %36 : vector<128x128xf32>
      %38 = math.absf %37 : vector<128x128xf32>
      %39 = arith.subf %32, %38 : vector<128x128xf32>
      %40 = arith.addf %26, %39 : vector<128x128xf32>
      %41 = vector.extract_strided_slice %10 {offsets = [0, 2], sizes = [128, 1], strides = [1, 1]} : vector<128x3xf32> to vector<128x1xf32>
      %42 = vector.extract_strided_slice %12 {offsets = [2, 0], sizes = [1, 128], strides = [1, 1]} : vector<3x128xf32> to vector<1x128xf32>
      %43 = vector.broadcast %41 : vector<128x1xf32> to vector<128x128xf32>
      %44 = vector.broadcast %42 : vector<1x128xf32> to vector<128x128xf32>
      %45 = arith.subf %43, %44 : vector<128x128xf32>
      %46 = math.absf %45 : vector<128x128xf32>
      %47 = vector.extract_strided_slice %11 {offsets = [0, 2], sizes = [128, 1], strides = [1, 1]} : vector<128x3xf32> to vector<128x1xf32>
      %48 = vector.extract_strided_slice %13 {offsets = [2, 0], sizes = [1, 128], strides = [1, 1]} : vector<3x128xf32> to vector<1x128xf32>
      %49 = vector.broadcast %47 : vector<128x1xf32> to vector<128x128xf32>
      %50 = vector.broadcast %48 : vector<1x128xf32> to vector<128x128xf32>
      %51 = arith.subf %49, %50 : vector<128x128xf32>
      %52 = math.absf %51 : vector<128x128xf32>
      %53 = arith.subf %46, %52 : vector<128x128xf32>
      %54 = arith.addf %40, %53 : vector<128x128xf32>
      %55 = math.absf %54 : vector<128x128xf32>
      %c0_10 = arith.constant 0 : index
      %c0_11 = arith.constant 0 : index
      %56 = vector.load %arg9[%c0_10, %c0_11] : memref<128x8xbf16, #tpu.memory_space<vmem>>, vector<128x8xbf16>
      %c0_12 = arith.constant 0 : index
      %c0_13 = arith.constant 0 : index
      %57 = vector.load %arg10[%c0_12, %c0_13] : memref<8x128xbf16, #tpu.memory_space<vmem>>, vector<8x128xbf16>
      %cst = arith.constant dense<0.000000e+00> : vector<128x128xf32>
      %58 = tpu.matmul %56, %57, %cst {dimension_numbers = #tpu.dot_dimension_numbers<[1], [0], [0], [1], [0, 0, 1, 1], [], []>} : vector<128x8xbf16>, vector<8x128xbf16>, vector<128x128xf32> -> vector<128x128xf32>
      %cst_14 = arith.constant 3.000000e+00 : f32
      %59 = vector.broadcast %cst_14 : f32 to vector<128x128xf32>
      %60 = arith.cmpf olt, %55, %59 : vector<128x128xf32>
      %cst_15 = arith.constant 0.000000e+00 : f32
      %61 = vector.broadcast %cst_15 : f32 to vector<128x128xf32>
      %62 = arith.select %60, %58, %61 : vector<128x128xi1>, vector<128x128xf32>
      %63 = arith.mulf %62, %55 : vector<128x128xf32>
      %64 = arith.sitofp %6 : i32 to f32
      %c0_16 = arith.constant 0 : index
      %c0_17 = arith.constant 0 : index
      %65 = vector.load %arg11[%c0_16, %c0_17] : memref<8x128xf32, #tpu.memory_space<vmem>>, vector<8x128xf32>
      %66 = vector.shape_cast %63 : vector<128x128xf32> to vector<16x8x128xf32>
      %cst_18 = arith.constant dense<0.000000e+00> : vector<8x128xf32>
      %67 = vector.multi_reduction <add>, %66, %cst_18 [0] : vector<16x8x128xf32> to vector<8x128xf32>
      %68 = vector.broadcast %64 : f32 to vector<8x128xf32>
      %69 = arith.mulf %68, %67 : vector<8x128xf32>
      %70 = arith.addf %65, %69 : vector<8x128xf32>
      %c0_19 = arith.constant 0 : index
      %c0_20 = arith.constant 0 : index
      %71 = vector.load %arg11[%c0_19, %c0_20] : memref<8x128xf32, #tpu.memory_space<vmem>>, vector<8x128xf32>
      tpu.vector_store %arg11[%c0_19, %c0_20], %70 {strides = array<i32>} : memref<8x128xf32, #tpu.memory_space<vmem>>, vector<8x128xf32>,
      %c0_21 = arith.constant 0 : index
      %c0_22 = arith.constant 0 : index
      %72 = vector.load %arg12[%c0_21, %c0_22] : memref<8x128xf32, #tpu.memory_space<vmem>>, vector<8x128xf32>
      %73 = vector.shape_cast %62 : vector<128x128xf32> to vector<16x8x128xf32>
      %cst_23 = arith.constant dense<0.000000e+00> : vector<8x128xf32>
      %74 = vector.multi_reduction <add>, %73, %cst_23 [0] : vector<16x8x128xf32> to vector<8x128xf32>
      %75 = vector.broadcast %64 : f32 to vector<8x128xf32>
      %76 = arith.mulf %75, %74 : vector<8x128xf32>
      %77 = arith.addf %72, %76 : vector<8x128xf32>
      %c0_24 = arith.constant 0 : index
      %c0_25 = arith.constant 0 : index
      %78 = vector.load %arg12[%c0_24, %c0_25] : memref<8x128xf32, #tpu.memory_space<vmem>>, vector<8x128xf32>
      tpu.vector_store %arg12[%c0_24, %c0_25], %77 {strides = array<i32>} : memref<8x128xf32, #tpu.memory_space<vmem>>, vector<8x128xf32>,
    } else {
    }
    return
  }
  func.func @transform_0(%arg0: i32, %arg1: i32, %arg2: memref<2xi32, #tpu.memory_space<smem>>, %arg3: memref<2xi32, #tpu.memory_space<smem>>, %arg4: memref<2xi32, #tpu.memory_space<smem>>) -> (i32, i32) {
    %c2_i32 = arith.constant 2 : i32
    %0 = arith.muli %arg0, %c2_i32 : i32
    %1 = arith.addi %0, %arg1 : i32
    %2 = arith.index_cast %1 : i32 to index
    %3 = memref.load %arg2[%2] : memref<2xi32, #tpu.memory_space<smem>>
    %c0_i32 = arith.constant 0 : i32
    %c0_i32_0 = arith.constant 0 : i32
    return %3, %c0_i32 : i32, i32
  }
  func.func @transform_1(%arg0: i32, %arg1: i32, %arg2: memref<2xi32, #tpu.memory_space<smem>>, %arg3: memref<2xi32, #tpu.memory_space<smem>>, %arg4: memref<2xi32, #tpu.memory_space<smem>>) -> (i32, i32) {
    %c2_i32 = arith.constant 2 : i32
    %0 = arith.muli %arg0, %c2_i32 : i32
    %1 = arith.addi %0, %arg1 : i32
    %2 = arith.index_cast %1 : i32 to index
    %3 = memref.load %arg2[%2] : memref<2xi32, #tpu.memory_space<smem>>
    %c0_i32 = arith.constant 0 : i32
    %c0_i32_0 = arith.constant 0 : i32
    return %3, %c0_i32 : i32, i32
  }
  func.func @transform_2(%arg0: i32, %arg1: i32, %arg2: memref<2xi32, #tpu.memory_space<smem>>, %arg3: memref<2xi32, #tpu.memory_space<smem>>, %arg4: memref<2xi32, #tpu.memory_space<smem>>) -> (i32, i32) {
    %c2_i32 = arith.constant 2 : i32
    %0 = arith.muli %arg0, %c2_i32 : i32
    %1 = arith.addi %0, %arg1 : i32
    %2 = arith.index_cast %1 : i32 to index
    %3 = memref.load %arg3[%2] : memref<2xi32, #tpu.memory_space<smem>>
    %c0_i32 = arith.constant 0 : i32
    %c0_i32_0 = arith.constant 0 : i32
    return %c0_i32, %3 : i32, i32
  }
  func.func @transform_3(%arg0: i32, %arg1: i32, %arg2: memref<2xi32, #tpu.memory_space<smem>>, %arg3: memref<2xi32, #tpu.memory_space<smem>>, %arg4: memref<2xi32, #tpu.memory_space<smem>>) -> (i32, i32) {
    %c2_i32 = arith.constant 2 : i32
    %0 = arith.muli %arg0, %c2_i32 : i32
    %1 = arith.addi %0, %arg1 : i32
    %2 = arith.index_cast %1 : i32 to index
    %3 = memref.load %arg3[%2] : memref<2xi32, #tpu.memory_space<smem>>
    %c0_i32 = arith.constant 0 : i32
    %c0_i32_0 = arith.constant 0 : i32
    return %c0_i32, %3 : i32, i32
  }
  func.func @transform_4(%arg0: i32, %arg1: i32, %arg2: memref<2xi32, #tpu.memory_space<smem>>, %arg3: memref<2xi32, #tpu.memory_space<smem>>, %arg4: memref<2xi32, #tpu.memory_space<smem>>) -> (i32, i32) {
    %c2_i32 = arith.constant 2 : i32
    %0 = arith.muli %arg0, %c2_i32 : i32
    %1 = arith.addi %0, %arg1 : i32
    %2 = arith.index_cast %1 : i32 to index
    %3 = memref.load %arg2[%2] : memref<2xi32, #tpu.memory_space<smem>>
    %c0_i32 = arith.constant 0 : i32
    %c0_i32_0 = arith.constant 0 : i32
    return %3, %c0_i32 : i32, i32
  }
  func.func @transform_5(%arg0: i32, %arg1: i32, %arg2: memref<2xi32, #tpu.memory_space<smem>>, %arg3: memref<2xi32, #tpu.memory_space<smem>>, %arg4: memref<2xi32, #tpu.memory_space<smem>>) -> (i32, i32) {
    %c2_i32 = arith.constant 2 : i32
    %0 = arith.muli %arg0, %c2_i32 : i32
    %1 = arith.addi %0, %arg1 : i32
    %2 = arith.index_cast %1 : i32 to index
    %3 = memref.load %arg3[%2] : memref<2xi32, #tpu.memory_space<smem>>
    %c0_i32 = arith.constant 0 : i32
    %c0_i32_0 = arith.constant 0 : i32
    return %c0_i32, %3 : i32, i32
  }
  func.func @transform_6(%arg0: i32, %arg1: i32, %arg2: memref<2xi32, #tpu.memory_space<smem>>, %arg3: memref<2xi32, #tpu.memory_space<smem>>, %arg4: memref<2xi32, #tpu.memory_space<smem>>) -> (i32, i32) {
    %c0_i32 = arith.constant 0 : i32
    %c0_i32_0 = arith.constant 0 : i32
    return %arg0, %c0_i32 : i32, i32
  }
  func.func @transform_7(%arg0: i32, %arg1: i32, %arg2: memref<2xi32, #tpu.memory_space<smem>>, %arg3: memref<2xi32, #tpu.memory_space<smem>>, %arg4: memref<2xi32, #tpu.memory_space<smem>>) -> (i32, i32) {
    %c0_i32 = arith.constant 0 : i32
    %c0_i32_0 = arith.constant 0 : i32
    return %arg0, %c0_i32 : i32, i32
  }
}

</mosaic_0001>

<llo_original>
// kernel: tpu_custom_call.1
$region0: #{tpu_custom_call.1}
  #allocation0 [shape = 'u32[]', space=smem, size = 0x4, offset = 0x4, fixed_abs, tag = 'smem constant byte address 0x4 - core index']
  #allocation1 [shape = 'u32[144,128]{1,0:T(1,128)}', space=vmem, size = 0x12000, scoped, tag = 'internal scratch']
  #allocation2 [shape = 's32[1]{0}', space=sflag, size = 0x4, scoped, tag = 'scoped memory for tpu_custom_call.1']
  #allocation3 [shape = 'u8[512]{0}', space=smem, size = 0x200, scoped, tag = 'prefetched SMEM operand 0']
  #allocation4 [shape = 'u8[512]{0}', space=smem, size = 0x200, scoped, tag = 'prefetched SMEM operand 1']
  #allocation5 [shape = 'u8[512]{0}', space=smem, size = 0x200, scoped, tag = 'prefetched SMEM operand 2']
  %s0 = inlined_call_operand.vmem [shape: s32[2], index: 0, kind: input, shape index: {}]
  %s1 = inlined_call_operand.vmem [shape: s32[2], index: 1, kind: input, shape index: {}]
  %s2 = inlined_call_operand.vmem [shape: s32[2], index: 2, kind: input, shape index: {}]
  %s3 = inlined_call_operand.vmem [shape: f32[128,3], index: 3, kind: input, shape index: {}]
  %s4 = inlined_call_operand.vmem [shape: f32[128,3], index: 4, kind: input, shape index: {}]
  %s5 = inlined_call_operand.vmem [shape: f32[3,128], index: 5, kind: input, shape index: {}]
  %s6 = inlined_call_operand.vmem [shape: f32[3,128], index: 6, kind: input, shape index: {}]
  %s7 = inlined_call_operand.vmem [shape: bf16[128,8], index: 7, kind: input, shape index: {}]
  %s8 = inlined_call_operand.vmem [shape: bf16[8,128], index: 8, kind: input, shape index: {}]
  %s9 = inlined_call_operand.hbm [shape: f32[8,128], index: 9, kind: output, shape index: {0}]
  %s10 = inlined_call_operand.hbm [shape: f32[8,128], index: 10, kind: output, shape index: {1}]
  %11 = xla_tuple %s9, %s10
  %s12 = sld [smem:[#allocation0]]
  $region73: #{tpu_custom_call.1} parent=0
    _
  %s14 = ssub.s32 1, %s12
  %s15 = scalar_select 0, %s14, %s12
  %s16 = sshll.u32 %s0, 4
  %s17 = int_to_ptr.vmem [resolvable:$true] %s16
  %19 = dma.vmem_to_smem %s17, 16, [#allocation3], [#allocation2]
  %s20 = sshll.u32 %s1, 4
  %s21 = int_to_ptr.vmem [resolvable:$true] %s20
  %23 = dma.vmem_to_smem %s21, 16, [#allocation4], [#allocation2]
  %s24 = sshll.u32 %s2, 4
  %s25 = int_to_ptr.vmem [resolvable:$true] %s24
  %27 = dma.vmem_to_smem %s25, 16, [#allocation5], [#allocation2]
  %28 = dma.done [#allocation2], 48
  %29 = sfence
  $region1: #{tpu_custom_call.1} parent=0
    #allocation6 [shape = 'u8[4096]{0}', space=vmem, size = 0x1000, scoped, tag = 'output window, operand 0, single buffered']
    #allocation7 [shape = 's32[2]{0}', space=sflag, size = 0x8, scoped, tag = 'scoped memory for tpu_custom_call.1']
    #allocation8 [shape = 'u8[4096]{0}', space=vmem, size = 0x1000, scoped, tag = 'output window, operand 1, single buffered']
    #allocation9 [shape = 's32[1]{0}', space=sflag, size = 0x4, scoped, tag = 'scoped memory for tpu_custom_call.1']
    %30 = vsyncpa [#allocation7], 0
    %31 = vsyncpa [#allocation9], 0
    loop: start=0, step=1, limit=4
    $region2: #{tpu_custom_call.1} parent=1 // loop_pre_header
      _
    $region3: #{tpu_custom_call.1} parent=1 // loop_header
      %s33 = sphi 0, %s37
      %p34 = scmp.ge.s32.totalorder %s33, 4
      %s40 = sphi 0, %s52
      %s41 = sphi 0, %s48
      %s42 = sphi 0, %s40
      %s43 = sphi 0, %s41
      %s44 = sphi 0, %s42
      %s45 = sphi 0, %s43
      %s61 = sphi 0, %s63
      %s64 = sphi 0, %s61
      %s65 = sphi 0, %s64
      %s81 = sphi 0, %s65
      %s93 = sphi 0, %s95
      %s96 = sphi 0, %s93
      %s97 = sphi 0, %s96
      %s113 = sphi 0, %s97
      %s125 = sphi 0, %s127
      %s128 = sphi 0, %s125
      %s129 = sphi 0, %s128
      %s145 = sphi 0, %s129
      %s157 = sphi 0, %s159
      %s160 = sphi 0, %s157
      %s161 = sphi 0, %s160
      %s177 = sphi 0, %s161
      %s189 = sphi 0, %s191
      %s192 = sphi 0, %s189
      %s193 = sphi 0, %s192
      %s209 = sphi 0, %s193
      %s221 = sphi 0, %s223
      %s224 = sphi 0, %s221
      %s225 = sphi 0, %s224
      %s241 = sphi 0, %s225
      %s247 = sphi 0, %s249
      %s250 = sphi 0, %s247
      %s251 = sphi 0, %s250
      %s267 = sphi 0, %s251
      %s273 = sphi 0, %s275
      %s276 = sphi 0, %s273
      %s277 = sphi 0, %s276
      %s293 = sphi 0, %s277
    $region4: #{tpu_custom_call.1} parent=1 // loop_header_branch
      %36 = sbr.rel (%p34) target = $region8
    $region5: #{tpu_custom_call.1} parent=1 // loop_body
      %s38 = ssub.s32 %s33, 1
      %s39 = ssub.s32 %s33, 2
      %s46 = sadd.s32 1, %s41
      %p47 = scmp.ge.s32.totalorder %s46, 2
      %s48 = scalar_select %p47, 0, %s46
      %s49 = sadd.s32 1, %s40
      %s50 = scalar_select %p47, %s49, %s40
      %p51 = scmp.ge.s32.totalorder %s50, 1
      %s52 = scalar_select %p51, 0, %s50
      %s53 = smul.u32 %s40, 2
      %s54 = sadd.s32 %s53, %s41
      %s55 = sld [smem:[#allocation3 + %s54]]
      %s56 = smul.u32 %s52, 2
      %s57 = sadd.s32 %s56, %s48
      %s58 = sld [smem:[#allocation3 + %s57]]
      %s59 = ssub.s32 %s55, %s58
      %p60 = scmp.eq.s32.totalorder %s59, 0
      %s62 = sadd.s32 %s61, 1
      %s63 = scalar_select %p60, %s61, %s62
      %p66 = pneg %p60
      %p67 = scmp.eq.s32.totalorder %s33, 1
      %p68 = por %p66, %p67
      %p69 = scmp.ne.s32.totalorder %s61, %s64
      %p70 = scmp.eq.s32.totalorder %s33, 0
      %p71 = por %p69, %p70
      %p72 = scmp.ne.s32.totalorder %s61, %s64
      %p73 = scmp.eq.s32.totalorder %s38, 1
      %p74 = por %p72, %p73
      %p75 = scmp.ne.s32.totalorder %s64, %s65
      %p76 = scmp.eq.s32.totalorder %s38, 0
      %p77 = por %p75, %p76
      %p78 = scmp.ne.s32.totalorder %s64, %s65
      %p79 = scmp.eq.s32.totalorder %s39, 1
      %p80 = por %p78, %p79
      %p82 = scmp.ne.s32.totalorder %s65, %s81
      %p83 = scmp.eq.s32.totalorder %s39, 0
      %p84 = por %p82, %p83
      %s85 = smul.u32 %s40, 2
      %s86 = sadd.s32 %s85, %s41
      %s87 = sld [smem:[#allocation3 + %s86]]
      %s88 = smul.u32 %s52, 2
      %s89 = sadd.s32 %s88, %s48
      %s90 = sld [smem:[#allocation3 + %s89]]
      %s91 = ssub.s32 %s87, %s90
      %p92 = scmp.eq.s32.totalorder %s91, 0
      %s94 = sadd.s32 %s93, 1
      %s95 = scalar_select %p92, %s93, %s94
      %p98 = pneg %p92
      %p99 = scmp.eq.s32.totalorder %s33, 1
      %p100 = por %p98, %p99
      %p101 = scmp.ne.s32.totalorder %s93, %s96
      %p102 = scmp.eq.s32.totalorder %s33, 0
      %p103 = por %p101, %p102
      %p104 = scmp.ne.s32.totalorder %s93, %s96
      %p105 = scmp.eq.s32.totalorder %s38, 1
      %p106 = por %p104, %p105
      %p107 = scmp.ne.s32.totalorder %s96, %s97
      %p108 = scmp.eq.s32.totalorder %s38, 0
      %p109 = por %p107, %p108
      %p110 = scmp.ne.s32.totalorder %s96, %s97
      %p111 = scmp.eq.s32.totalorder %s39, 1
      %p112 = por %p110, %p111
      %p114 = scmp.ne.s32.totalorder %s97, %s113
      %p115 = scmp.eq.s32.totalorder %s39, 0
      %p116 = por %p114, %p115
      %s117 = smul.u32 %s40, 2
      %s118 = sadd.s32 %s117, %s41
      %s119 = sld [smem:[#allocation4 + %s118]]
      %s120 = smul.u32 %s52, 2
      %s121 = sadd.s32 %s120, %s48
      %s122 = sld [smem:[#allocation4 + %s121]]
      %s123 = ssub.s32 %s119, %s122
      %p124 = scmp.eq.s32.totalorder %s123, 0
      %s126 = sadd.s32 %s125, 1
      %s127 = scalar_select %p124, %s125, %s126
      %p130 = pneg %p124
      %p131 = scmp.eq.s32.totalorder %s33, 1
      %p132 = por %p130, %p131
      %p133 = scmp.ne.s32.totalorder %s125, %s128
      %p134 = scmp.eq.s32.totalorder %s33, 0
      %p135 = por %p133, %p134
      %p136 = scmp.ne.s32.totalorder %s125, %s128
      %p137 = scmp.eq.s32.totalorder %s38, 1
      %p138 = por %p136, %p137
      %p139 = scmp.ne.s32.totalorder %s128, %s129
      %p140 = scmp.eq.s32.totalorder %s38, 0
      %p141 = por %p139, %p140
      %p142 = scmp.ne.s32.totalorder %s128, %s129
      %p143 = scmp.eq.s32.totalorder %s39, 1
      %p144 = por %p142, %p143
      %p146 = scmp.ne.s32.totalorder %s129, %s145
      %p147 = scmp.eq.s32.totalorder %s39, 0
      %p148 = por %p146, %p147
      %s149 = smul.u32 %s40, 2
      %s150 = sadd.s32 %s149, %s41
      %s151 = sld [smem:[#allocation4 + %s150]]
      %s152 = smul.u32 %s52, 2
      %s153 = sadd.s32 %s152, %s48
      %s154 = sld [smem:[#allocation4 + %s153]]
      %s155 = ssub.s32 %s151, %s154
      %p156 = scmp.eq.s32.totalorder %s155, 0
      %s158 = sadd.s32 %s157, 1
      %s159 = scalar_select %p156, %s157, %s158
      %p162 = pneg %p156
      %p163 = scmp.eq.s32.totalorder %s33, 1
      %p164 = por %p162, %p163
      %p165 = scmp.ne.s32.totalorder %s157, %s160
      %p166 = scmp.eq.s32.totalorder %s33, 0
      %p167 = por %p165, %p166
      %p168 = scmp.ne.s32.totalorder %s157, %s160
      %p169 = scmp.eq.s32.totalorder %s38, 1
      %p170 = por %p168, %p169
      %p171 = scmp.ne.s32.totalorder %s160, %s161
      %p172 = scmp.eq.s32.totalorder %s38, 0
      %p173 = por %p171, %p172
      %p174 = scmp.ne.s32.totalorder %s160, %s161
      %p175 = scmp.eq.s32.totalorder %s39, 1
      %p176 = por %p174, %p175
      %p178 = scmp.ne.s32.totalorder %s161, %s177
      %p179 = scmp.eq.s32.totalorder %s39, 0
      %p180 = por %p178, %p179
      %s181 = smul.u32 %s40, 2
      %s182 = sadd.s32 %s181, %s41
      %s183 = sld [smem:[#allocation3 + %s182]]
      %s184 = smul.u32 %s52, 2
      %s185 = sadd.s32 %s184, %s48
      %s186 = sld [smem:[#allocation3 + %s185]]
      %s187 = ssub.s32 %s183, %s186
      %p188 = scmp.eq.s32.totalorder %s187, 0
      %s190 = sadd.s32 %s189, 1
      %s191 = scalar_select %p188, %s189, %s190
      %p194 = pneg %p188
      %p195 = scmp.eq.s32.totalorder %s33, 1
      %p196 = por %p194, %p195
      %p197 = scmp.ne.s32.totalorder %s189, %s192
      %p198 = scmp.eq.s32.totalorder %s33, 0
      %p199 = por %p197, %p198
      %p200 = scmp.ne.s32.totalorder %s189, %s192
      %p201 = scmp.eq.s32.totalorder %s38, 1
      %p202 = por %p200, %p201
      %p203 = scmp.ne.s32.totalorder %s192, %s193
      %p204 = scmp.eq.s32.totalorder %s38, 0
      %p205 = por %p203, %p204
      %p206 = scmp.ne.s32.totalorder %s192, %s193
      %p207 = scmp.eq.s32.totalorder %s39, 1
      %p208 = por %p206, %p207
      %p210 = scmp.ne.s32.totalorder %s193, %s209
      %p211 = scmp.eq.s32.totalorder %s39, 0
      %p212 = por %p210, %p211
      %s213 = smul.u32 %s40, 2
      %s214 = sadd.s32 %s213, %s41
      %s215 = sld [smem:[#allocation4 + %s214]]
      %s216 = smul.u32 %s52, 2
      %s217 = sadd.s32 %s216, %s48
      %s218 = sld [smem:[#allocation4 + %s217]]
      %s219 = ssub.s32 %s215, %s218
      %p220 = scmp.eq.s32.totalorder %s219, 0
      %s222 = sadd.s32 %s221, 1
      %s223 = scalar_select %p220, %s221, %s222
      %p226 = pneg %p220
      %p227 = scmp.eq.s32.totalorder %s33, 1
      %p228 = por %p226, %p227
      %p229 = scmp.ne.s32.totalorder %s221, %s224
      %p230 = scmp.eq.s32.totalorder %s33, 0
      %p231 = por %p229, %p230
      %p232 = scmp.ne.s32.totalorder %s221, %s224
      %p233 = scmp.eq.s32.totalorder %s38, 1
      %p234 = por %p232, %p233
      %p235 = scmp.ne.s32.totalorder %s224, %s225
      %p236 = scmp.eq.s32.totalorder %s38, 0
      %p237 = por %p235, %p236
      %p238 = scmp.ne.s32.totalorder %s224, %s225
      %p239 = scmp.eq.s32.totalorder %s39, 1
      %p240 = por %p238, %p239
      %p242 = scmp.ne.s32.totalorder %s225, %s241
      %p243 = scmp.eq.s32.totalorder %s39, 0
      %p244 = por %p242, %p243
      %s245 = ssub.s32 %s40, %s52
      %p246 = scmp.eq.s32.totalorder %s245, 0
      %s248 = sadd.s32 %s247, 1
      %s249 = scalar_select %p246, %s247, %s248
      %p252 = pneg %p246
      %p253 = scmp.eq.s32.totalorder %s33, 1
      %p254 = por %p252, %p253
      %p255 = scmp.ne.s32.totalorder %s247, %s250
      %p256 = scmp.eq.s32.totalorder %s33, 0
      %p257 = por %p255, %p256
      %p258 = scmp.ne.s32.totalorder %s247, %s250
      %p259 = scmp.eq.s32.totalorder %s38, 1
      %p260 = por %p258, %p259
      %p261 = scmp.ne.s32.totalorder %s250, %s251
      %p262 = scmp.eq.s32.totalorder %s38, 0
      %p263 = por %p261, %p262
      %p264 = scmp.ne.s32.totalorder %s250, %s251
      %p265 = scmp.eq.s32.totalorder %s39, 1
      %p266 = por %p264, %p265
      %p268 = scmp.ne.s32.totalorder %s251, %s267
      %p269 = scmp.eq.s32.totalorder %s39, 0
      %p270 = por %p268, %p269
      %s271 = ssub.s32 %s40, %s52
      %p272 = scmp.eq.s32.totalorder %s271, 0
      %s274 = sadd.s32 %s273, 1
      %s275 = scalar_select %p272, %s273, %s274
      %p278 = pneg %p272
      %p279 = scmp.eq.s32.totalorder %s33, 1
      %p280 = por %p278, %p279
      %p281 = scmp.ne.s32.totalorder %s273, %s276
      %p282 = scmp.eq.s32.totalorder %s33, 0
      %p283 = por %p281, %p282
      %p284 = scmp.ne.s32.totalorder %s273, %s276
      %p285 = scmp.eq.s32.totalorder %s38, 1
      %p286 = por %p284, %p285
      %p287 = scmp.ne.s32.totalorder %s276, %s277
      %p288 = scmp.eq.s32.totalorder %s38, 0
      %p289 = por %p287, %p288
      %p290 = scmp.ne.s32.totalorder %s276, %s277
      %p291 = scmp.eq.s32.totalorder %s39, 1
      %p292 = por %p290, %p291
      %p294 = scmp.ne.s32.totalorder %s277, %s293
      %p295 = scmp.eq.s32.totalorder %s39, 0
      %p296 = por %p294, %p295
      %p297 = scmp.le.s32.totalorder 1, %s33
      %p298 = scmp.lt.s32.totalorder %s33, 3
      %p299 = pnand %p297, %p298
      %p300 = pneg %p299
      // Predicated region
      $region9: #{tpu_custom_call.1} parent=5 // pred_check
        _
      $region10: #{tpu_custom_call.1} parent=5 // pred_check_branch
        %302 = sbr.rel (%p299) target = $region12
      $region11: #{tpu_custom_call.1} parent=5 // pred_region
        %s303 = ssub.s32 %s33, 1
      $region12: #{tpu_custom_call.1} parent=5 // pred_fallthru
        _
      %p304 = scmp.lt.s32.totalorder %s33, 2
      // Predicated region
      $region13: #{tpu_custom_call.1} parent=5 // pred_check
        %p305 = pneg %p304
      $region14: #{tpu_custom_call.1} parent=5 // pred_check_branch
        %307 = sbr.rel (%p305) target = $region16
      $region15: #{tpu_custom_call.1} parent=5 // pred_region
        // Predicated region
        $region17: #{tpu_custom_call.1} parent=15 // pred_check
          %p308 = pneg %p71
        $region18: #{tpu_custom_call.1} parent=15 // pred_check_branch
          %310 = sbr.rel (%p308) target = $region20
        $region19: #{tpu_custom_call.1} parent=15 // pred_region
          %s311 = smul.u32 %s40, 2
          %s312 = sadd.s32 %s311, %s41
          %s313 = sld [smem:[#allocation3 + %s312]]
          %s314 = smul.u32 16, %s313
          %p315 = scmp.lt.s32.totalorder %s314, 15
          %s316 = scalar_select %p315, %s314, 15
          %s317 = smul.addr %s316, 8
          %s318 = scalar_lea.vmem %s3, %s317
          %s319 = smul.u32 %s40, 2
          %s320 = sadd.s32 %s319, %s41
          %s321 = sld [smem:[#allocation3 + %s320]]
          %s322 = smul.u32 16, %s321
        $region20: #{tpu_custom_call.1} parent=15 // pred_fallthru
          _
        // Predicated region
        $region21: #{tpu_custom_call.1} parent=15 // pred_check
          %p323 = pneg %p103
        $region22: #{tpu_custom_call.1} parent=15 // pred_check_branch
          %325 = sbr.rel (%p323) target = $region24
        $region23: #{tpu_custom_call.1} parent=15 // pred_region
          %s326 = smul.u32 %s40, 2
          %s327 = sadd.s32 %s326, %s41
          %s328 = sld [smem:[#allocation3 + %s327]]
          %s329 = smul.u32 16, %s328
          %p330 = scmp.lt.s32.totalorder %s329, 15
          %s331 = scalar_select %p330, %s329, 15
          %s332 = smul.addr %s331, 8
          %s333 = scalar_lea.vmem %s4, %s332
          %s334 = smul.u32 %s40, 2
          %s335 = sadd.s32 %s334, %s41
          %s336 = sld [smem:[#allocation3 + %s335]]
          %s337 = smul.u32 16, %s336
        $region24: #{tpu_custom_call.1} parent=15 // pred_fallthru
          _
        // Predicated region
        $region25: #{tpu_custom_call.1} parent=15 // pred_check
          %p338 = pneg %p135
        $region26: #{tpu_custom_call.1} parent=15 // pred_check_branch
          %340 = sbr.rel (%p338) target = $region28
        $region27: #{tpu_custom_call.1} parent=15 // pred_region
          %s341 = smul.u32 %s40, 2
          %s342 = sadd.s32 %s341, %s41
          %s343 = sld [smem:[#allocation4 + %s342]]
          %p344 = scmp.lt.s32.totalorder %s343, 0
          %s345 = scalar_select %p344, %s343, 0
          %s346 = smul.addr %s345, 4
          %s347 = scalar_lea.vmem %s5, %s346
          %s348 = smul.u32 %s40, 2
          %s349 = sadd.s32 %s348, %s41
          %s350 = sld [smem:[#allocation4 + %s349]]
        $region28: #{tpu_custom_call.1} parent=15 // pred_fallthru
          _
        // Predicated region
        $region29: #{tpu_custom_call.1} parent=15 // pred_check
          %p351 = pneg %p167
        $region30: #{tpu_custom_call.1} parent=15 // pred_check_branch
          %353 = sbr.rel (%p351) target = $region32
        $region31: #{tpu_custom_call.1} parent=15 // pred_region
          %s354 = smul.u32 %s40, 2
          %s355 = sadd.s32 %s354, %s41
          %s356 = sld [smem:[#allocation4 + %s355]]
          %p357 = scmp.lt.s32.totalorder %s356, 0
          %s358 = scalar_select %p357, %s356, 0
          %s359 = smul.addr %s358, 4
          %s360 = scalar_lea.vmem %s6, %s359
          %s361 = smul.u32 %s40, 2
          %s362 = sadd.s32 %s361, %s41
          %s363 = sld [smem:[#allocation4 + %s362]]
        $region32: #{tpu_custom_call.1} parent=15 // pred_fallthru
          _
        // Predicated region
        $region33: #{tpu_custom_call.1} parent=15 // pred_check
          %p364 = pneg %p199
        $region34: #{tpu_custom_call.1} parent=15 // pred_check_branch
          %366 = sbr.rel (%p364) target = $region36
        $region35: #{tpu_custom_call.1} parent=15 // pred_region
          %s367 = smul.u32 %s40, 2
          %s368 = sadd.s32 %s367, %s41
          %s369 = sld [smem:[#allocation3 + %s368]]
          %s370 = smul.u32 16, %s369
          %p371 = scmp.lt.s32.totalorder %s370, 15
          %s372 = scalar_select %p371, %s370, 15
          %s373 = smul.addr %s372, 4
          %s374 = scalar_lea.vmem %s7, %s373
          %s375 = smul.u32 %s40, 2
          %s376 = sadd.s32 %s375, %s41
          %s377 = sld [smem:[#allocation3 + %s376]]
          %s378 = smul.u32 16, %s377
        $region36: #{tpu_custom_call.1} parent=15 // pred_fallthru
          _
        // Predicated region
        $region37: #{tpu_custom_call.1} parent=15 // pred_check
          %p379 = pneg %p231
        $region38: #{tpu_custom_call.1} parent=15 // pred_check_branch
          %381 = sbr.rel (%p379) target = $region40
        $region39: #{tpu_custom_call.1} parent=15 // pred_region
          %s382 = smul.u32 %s40, 2
          %s383 = sadd.s32 %s382, %s41
          %s384 = sld [smem:[#allocation4 + %s383]]
          %p385 = scmp.lt.s32.totalorder %s384, 0
          %s386 = scalar_select %p385, %s384, 0
          %s387 = smul.addr %s386, 4
          %s388 = scalar_lea.vmem %s8, %s387
          %s389 = smul.u32 %s40, 2
          %s390 = sadd.s32 %s389, %s41
          %s391 = sld [smem:[#allocation4 + %s390]]
        $region40: #{tpu_custom_call.1} parent=15 // pred_fallthru
          _
      $region16: #{tpu_custom_call.1} parent=5 // pred_fallthru
        _
      %p392 = scmp.le.s32.totalorder 1, %s33
      %p393 = scmp.lt.s32.totalorder %s33, 3
      %p394 = pnand %p392, %p393
      %p395 = pneg %p394
      // Predicated region
      $region41: #{tpu_custom_call.1} parent=5 // pred_check
        _
      $region42: #{tpu_custom_call.1} parent=5 // pred_check_branch
        %397 = sbr.rel (%p394) target = $region44
      $region43: #{tpu_custom_call.1} parent=5 // pred_region
        %s398 = ssub.s32 %s33, 1
        %s399 = smul.u32 %s42, 2
        %s400 = sadd.s32 %s399, %s43
        %s401 = sld [smem:[#allocation3 + %s400]]
        %s402 = smul.u32 16, %s401
        %p403 = scmp.lt.s32.totalorder %s402, 15
        %s404 = scalar_select %p403, %s402, 15
        %s405 = smul.addr %s404, 8
        %s406 = scalar_lea.vmem %s3, %s405
        %p407 = pneg %p77
        %p408 = pneg %p74
        %s409 = smul.u32 %s42, 2
        %s410 = sadd.s32 %s409, %s43
        %s411 = sld [smem:[#allocation3 + %s410]]
        %s412 = smul.u32 16, %s411
        %p413 = scmp.lt.s32.totalorder %s412, 15
        %s414 = scalar_select %p413, %s412, 15
        %s415 = smul.addr %s414, 8
        %s416 = scalar_lea.vmem %s4, %s415
        %p417 = pneg %p109
        %p418 = pneg %p106
        %s419 = smul.u32 %s42, 2
        %s420 = sadd.s32 %s419, %s43
        %s421 = sld [smem:[#allocation4 + %s420]]
        %p422 = scmp.lt.s32.totalorder %s421, 0
        %s423 = scalar_select %p422, %s421, 0
        %s424 = smul.addr %s423, 4
        %s425 = scalar_lea.vmem %s5, %s424
        %p426 = pneg %p141
        %p427 = pneg %p138
        %s428 = smul.u32 %s42, 2
        %s429 = sadd.s32 %s428, %s43
        %s430 = sld [smem:[#allocation4 + %s429]]
        %p431 = scmp.lt.s32.totalorder %s430, 0
        %s432 = scalar_select %p431, %s430, 0
        %s433 = smul.addr %s432, 4
        %s434 = scalar_lea.vmem %s6, %s433
        %p435 = pneg %p173
        %p436 = pneg %p170
        %s437 = smul.u32 %s42, 2
        %s438 = sadd.s32 %s437, %s43
        %s439 = sld [smem:[#allocation3 + %s438]]
        %s440 = smul.u32 16, %s439
        %p441 = scmp.lt.s32.totalorder %s440, 15
        %s442 = scalar_select %p441, %s440, 15
        %s443 = smul.addr %s442, 4
        %s444 = scalar_lea.vmem %s7, %s443
        %p445 = pneg %p205
        %p446 = pneg %p202
        %s447 = smul.u32 %s42, 2
        %s448 = sadd.s32 %s447, %s43
        %s449 = sld [smem:[#allocation4 + %s448]]
        %p450 = scmp.lt.s32.totalorder %s449, 0
        %s451 = scalar_select %p450, %s449, 0
        %s452 = smul.addr %s451, 4
        %s453 = scalar_lea.vmem %s8, %s452
        %p454 = pneg %p237
        %p455 = pneg %p234
        %p456 = pneg %p263
        %p457 = pneg %p260
        %p458 = pneg %p289
        %p459 = pneg %p286
        %s460 = smul.u32 %s42, 2
        %s461 = sadd.s32 %s460, %s43
        %s462 = sld [smem:[#allocation3 + %s461]]
        %s463 = smul.u32 16, %s462
        %p464 = scmp.lt.s32.totalorder %s463, 15
        %s465 = scalar_select %p464, %s463, 15
        %s466 = smul.addr %s465, 8
        %s467 = scalar_lea.vmem %s3, %s466
        %s468 = smul.u32 %s42, 2
        %s469 = sadd.s32 %s468, %s43
        %s470 = sld [smem:[#allocation3 + %s469]]
        %s471 = smul.u32 16, %s470
        %s472 = smul.u32 %s42, 2
        %s473 = sadd.s32 %s472, %s43
        %s474 = sld [smem:[#allocation3 + %s473]]
        %s475 = smul.u32 16, %s474
        %p476 = scmp.lt.s32.totalorder %s475, 15
        %s477 = scalar_select %p476, %s475, 15
        %s478 = smul.addr %s477, 8
        %s479 = scalar_lea.vmem %s4, %s478
        %s480 = smul.u32 %s42, 2
        %s481 = sadd.s32 %s480, %s43
        %s482 = sld [smem:[#allocation3 + %s481]]
        %s483 = smul.u32 16, %s482
        %s484 = smul.u32 %s42, 2
        %s485 = sadd.s32 %s484, %s43
        %s486 = sld [smem:[#allocation4 + %s485]]
        %p487 = scmp.lt.s32.totalorder %s486, 0
        %s488 = scalar_select %p487, %s486, 0
        %s489 = smul.addr %s488, 4
        %s490 = scalar_lea.vmem %s5, %s489
        %s491 = smul.u32 %s42, 2
        %s492 = sadd.s32 %s491, %s43
        %s493 = sld [smem:[#allocation4 + %s492]]
        %s494 = smul.u32 %s42, 2
        %s495 = sadd.s32 %s494, %s43
        %s496 = sld [smem:[#allocation4 + %s495]]
        %p497 = scmp.lt.s32.totalorder %s496, 0
        %s498 = scalar_select %p497, %s496, 0
        %s499 = smul.addr %s498, 4
        %s500 = scalar_lea.vmem %s6, %s499
        %s501 = smul.u32 %s42, 2
        %s502 = sadd.s32 %s501, %s43
        %s503 = sld [smem:[#allocation4 + %s502]]
        %s504 = smul.u32 %s42, 2
        %s505 = sadd.s32 %s504, %s43
        %s506 = sld [smem:[#allocation3 + %s505]]
        %s507 = smul.u32 16, %s506
        %p508 = scmp.lt.s32.totalorder %s507, 15
        %s509 = scalar_select %p508, %s507, 15
        %s510 = smul.addr %s509, 4
        %s511 = scalar_lea.vmem %s7, %s510
        %s512 = smul.u32 %s42, 2
        %s513 = sadd.s32 %s512, %s43
        %s514 = sld [smem:[#allocation3 + %s513]]
        %s515 = smul.u32 16, %s514
        %s516 = smul.u32 %s42, 2
        %s517 = sadd.s32 %s516, %s43
        %s518 = sld [smem:[#allocation4 + %s517]]
        %p519 = scmp.lt.s32.totalorder %s518, 0
        %s520 = scalar_select %p519, %s518, 0
        %s521 = smul.addr %s520, 4
        %s522 = scalar_lea.vmem %s8, %s521
        %s523 = smul.u32 %s42, 2
        %s524 = sadd.s32 %s523, %s43
        %s525 = sld [smem:[#allocation4 + %s524]]
        %p527 = scmp.eq.s32.totalorder %s43, 0
        // Predicated region
        $region45: #{tpu_custom_call.1} parent=43 // pred_check
          %p528 = pneg %p527
        $region46: #{tpu_custom_call.1} parent=43 // pred_check_branch
          %530 = sbr.rel (%p528) target = $region48
        $region47: #{tpu_custom_call.1} parent=43 // pred_region
          %531 = vst [vmem:[#allocation6] sm:$0xff] 0.0
          %532 = vst [vmem:[#allocation8] sm:$0xff] 0.0
        $region48: #{tpu_custom_call.1} parent=43 // pred_fallthru
          _
        %s533 = smul.u32 %s42, 2
        %s534 = sadd.s32 %s533, %s43
        %s535 = sld [smem:[#allocation5 + %s534]]
        %p536 = scmp.gt.s32.totalorder %s535, 0
        // Predicated region
        $region49: #{tpu_custom_call.1} parent=43 // pred_check
          %p537 = pneg %p536
        $region50: #{tpu_custom_call.1} parent=43 // pred_check_branch
          %539 = sbr.rel (%p537) target = $region52
        $region51: #{tpu_custom_call.1} parent=43 // pred_region
          %v540 = vld [vmem:[%s467] sm:$0xff]
          %v541 = vld [vmem:[%s467 + $0x8] sm:$0xff]
          %v542 = vld [vmem:[%s467 + $0x10] sm:$0xff]
          %v543 = vld [vmem:[%s467 + $0x18] sm:$0xff]
          %v544 = vld [vmem:[%s467 + $0x20] sm:$0xff]
          %v545 = vld [vmem:[%s467 + $0x28] sm:$0xff]
          %v546 = vld [vmem:[%s467 + $0x30] sm:$0xff]
          %v547 = vld [vmem:[%s467 + $0x38] sm:$0xff]
          %v548 = vld [vmem:[%s467 + $0x40] sm:$0xff]
          %v549 = vld [vmem:[%s467 + $0x48] sm:$0xff]
          %v550 = vld [vmem:[%s467 + $0x50] sm:$0xff]
          %v551 = vld [vmem:[%s467 + $0x58] sm:$0xff]
          %v552 = vld [vmem:[%s467 + $0x60] sm:$0xff]
          %v553 = vld [vmem:[%s467 + $0x68] sm:$0xff]
          %v554 = vld [vmem:[%s467 + $0x70] sm:$0xff]
          %v555 = vld [vmem:[%s467 + $0x78] sm:$0xff]
          %v556 = vld [vmem:[%s479] sm:$0xff]
          %v557 = vld [vmem:[%s479 + $0x8] sm:$0xff]
          %v558 = vld [vmem:[%s479 + $0x10] sm:$0xff]
          %v559 = vld [vmem:[%s479 + $0x18] sm:$0xff]
          %v560 = vld [vmem:[%s479 + $0x20] sm:$0xff]
          %v561 = vld [vmem:[%s479 + $0x28] sm:$0xff]
          %v562 = vld [vmem:[%s479 + $0x30] sm:$0xff]
          %v563 = vld [vmem:[%s479 + $0x38] sm:$0xff]
          %v564 = vld [vmem:[%s479 + $0x40] sm:$0xff]
          %v565 = vld [vmem:[%s479 + $0x48] sm:$0xff]
          %v566 = vld [vmem:[%s479 + $0x50] sm:$0xff]
          %v567 = vld [vmem:[%s479 + $0x58] sm:$0xff]
          %v568 = vld [vmem:[%s479 + $0x60] sm:$0xff]
          %v569 = vld [vmem:[%s479 + $0x68] sm:$0xff]
          %v570 = vld [vmem:[%s479 + $0x70] sm:$0xff]
          %v571 = vld [vmem:[%s479 + $0x78] sm:$0xff]
          %v572 = vld [vmem:[%s490] sm:$0x7]
          %v573 = vld [vmem:[%s500] sm:$0x7]
          %575 = vset.pattern.permute.xlu0 0
          %576 = vperm.xlu0 %575, %v540
          %v577 = vpop.permute.xlu0 %576
          %580 = vset.pattern.permute.xlu0 0
          %581 = vperm.xlu0 %580, %v541
          %v582 = vpop.permute.xlu0 %581
          %585 = vset.pattern.permute.xlu0 0
          %586 = vperm.xlu0 %585, %v542
          %v587 = vpop.permute.xlu0 %586
          %590 = vset.pattern.permute.xlu0 0
          %591 = vperm.xlu0 %590, %v543
          %v592 = vpop.permute.xlu0 %591
          %595 = vset.pattern.permute.xlu0 0
          %596 = vperm.xlu0 %595, %v544
          %v597 = vpop.permute.xlu0 %596
          %600 = vset.pattern.permute.xlu0 0
          %601 = vperm.xlu0 %600, %v545
          %v602 = vpop.permute.xlu0 %601
          %605 = vset.pattern.permute.xlu0 0
          %606 = vperm.xlu0 %605, %v546
          %v607 = vpop.permute.xlu0 %606
          %610 = vset.pattern.permute.xlu0 0
          %611 = vperm.xlu0 %610, %v547
          %v612 = vpop.permute.xlu0 %611
          %615 = vset.pattern.permute.xlu0 0
          %616 = vperm.xlu0 %615, %v548
          %v617 = vpop.permute.xlu0 %616
          %620 = vset.pattern.permute.xlu0 0
          %621 = vperm.xlu0 %620, %v549
          %v622 = vpop.permute.xlu0 %621
          %625 = vset.pattern.permute.xlu0 0
          %626 = vperm.xlu0 %625, %v550
          %v627 = vpop.permute.xlu0 %626
          %630 = vset.pattern.permute.xlu0 0
          %631 = vperm.xlu0 %630, %v551
          %v632 = vpop.permute.xlu0 %631
          %635 = vset.pattern.permute.xlu0 0
          %636 = vperm.xlu0 %635, %v552
          %v637 = vpop.permute.xlu0 %636
          %640 = vset.pattern.permute.xlu0 0
          %641 = vperm.xlu0 %640, %v553
          %v642 = vpop.permute.xlu0 %641
          %645 = vset.pattern.permute.xlu0 0
          %646 = vperm.xlu0 %645, %v554
          %v647 = vpop.permute.xlu0 %646
          %650 = vset.pattern.permute.xlu0 0
          %651 = vperm.xlu0 %650, %v555
          %v652 = vpop.permute.xlu0 %651
          %v654 = vlaneseq
          %v655 = vshrl.u32 %v654, 7
          %v656 = vsub.s32 0, %v655
          %v657 = vrot.slane %v572, %v656
          %v658 = vsub.f32 %v577, %v657
          %v659 = vsub.f32 %v582, %v657
          %v660 = vsub.f32 %v587, %v657
          %v661 = vsub.f32 %v592, %v657
          %v662 = vsub.f32 %v597, %v657
          %v663 = vsub.f32 %v602, %v657
          %v664 = vsub.f32 %v607, %v657
          %v665 = vsub.f32 %v612, %v657
          %v666 = vsub.f32 %v617, %v657
          %v667 = vsub.f32 %v622, %v657
          %v668 = vsub.f32 %v627, %v657
          %v669 = vsub.f32 %v632, %v657
          %v670 = vsub.f32 %v637, %v657
          %v671 = vsub.f32 %v642, %v657
          %v672 = vsub.f32 %v647, %v657
          %v673 = vsub.f32 %v652, %v657
          %v674 = vand.u32 2147483647, %v658
          %v675 = vand.u32 2147483647, %v659
          %v676 = vand.u32 2147483647, %v660
          %v677 = vand.u32 2147483647, %v661
          %v678 = vand.u32 2147483647, %v662
          %v679 = vand.u32 2147483647, %v663
          %v680 = vand.u32 2147483647, %v664
          %v681 = vand.u32 2147483647, %v665
          %v682 = vand.u32 2147483647, %v666
          %v683 = vand.u32 2147483647, %v667
          %v684 = vand.u32 2147483647, %v668
          %v685 = vand.u32 2147483647, %v669
          %v686 = vand.u32 2147483647, %v670
          %v687 = vand.u32 2147483647, %v671
          %v688 = vand.u32 2147483647, %v672
          %v689 = vand.u32 2147483647, %v673
          %691 = vset.pattern.permute.xlu0 0
          %692 = vperm.xlu0 %691, %v556
          %v693 = vpop.permute.xlu0 %692
          %696 = vset.pattern.permute.xlu0 0
          %697 = vperm.xlu0 %696, %v557
          %v698 = vpop.permute.xlu0 %697
          %701 = vset.pattern.permute.xlu0 0
          %702 = vperm.xlu0 %701, %v558
          %v703 = vpop.permute.xlu0 %702
          %706 = vset.pattern.permute.xlu0 0
          %707 = vperm.xlu0 %706, %v559
          %v708 = vpop.permute.xlu0 %707
          %711 = vset.pattern.permute.xlu0 0
          %712 = vperm.xlu0 %711, %v560
          %v713 = vpop.permute.xlu0 %712
          %716 = vset.pattern.permute.xlu0 0
          %717 = vperm.xlu0 %716, %v561
          %v718 = vpop.permute.xlu0 %717
          %721 = vset.pattern.permute.xlu0 0
          %722 = vperm.xlu0 %721, %v562
          %v723 = vpop.permute.xlu0 %722
          %726 = vset.pattern.permute.xlu0 0
          %727 = vperm.xlu0 %726, %v563
          %v728 = vpop.permute.xlu0 %727
          %731 = vset.pattern.permute.xlu0 0
          %732 = vperm.xlu0 %731, %v564
          %v733 = vpop.permute.xlu0 %732
          %736 = vset.pattern.permute.xlu0 0
          %737 = vperm.xlu0 %736, %v565
          %v738 = vpop.permute.xlu0 %737
          %741 = vset.pattern.permute.xlu0 0
          %742 = vperm.xlu0 %741, %v566
          %v743 = vpop.permute.xlu0 %742
          %746 = vset.pattern.permute.xlu0 0
          %747 = vperm.xlu0 %746, %v567
          %v748 = vpop.permute.xlu0 %747
          %751 = vset.pattern.permute.xlu0 0
          %752 = vperm.xlu0 %751, %v568
          %v753 = vpop.permute.xlu0 %752
          %756 = vset.pattern.permute.xlu0 0
          %757 = vperm.xlu0 %756, %v569
          %v758 = vpop.permute.xlu0 %757
          %761 = vset.pattern.permute.xlu0 0
          %762 = vperm.xlu0 %761, %v570
          %v763 = vpop.permute.xlu0 %762
          %766 = vset.pattern.permute.xlu0 0
          %767 = vperm.xlu0 %766, %v571
          %v768 = vpop.permute.xlu0 %767
          %v770 = vlaneseq
          %v771 = vshrl.u32 %v770, 7
          %v772 = vsub.s32 0, %v771
          %v773 = vrot.slane %v573, %v772
          %v774 = vsub.f32 %v693, %v773
          %v775 = vsub.f32 %v698, %v773
          %v776 = vsub.f32 %v703, %v773
          %v777 = vsub.f32 %v708, %v773
          %v778 = vsub.f32 %v713, %v773
          %v779 = vsub.f32 %v718, %v773
          %v780 = vsub.f32 %v723, %v773
          %v781 = vsub.f32 %v728, %v773
          %v782 = vsub.f32 %v733, %v773
          %v783 = vsub.f32 %v738, %v773
          %v784 = vsub.f32 %v743, %v773
          %v785 = vsub.f32 %v748, %v773
          %v786 = vsub.f32 %v753, %v773
          %v787 = vsub.f32 %v758, %v773
          %v788 = vsub.f32 %v763, %v773
          %v789 = vsub.f32 %v768, %v773
          %v790 = vand.u32 2147483647, %v774
          %v791 = vand.u32 2147483647, %v775
          %v792 = vand.u32 2147483647, %v776
          %v793 = vand.u32 2147483647, %v777
          %v794 = vand.u32 2147483647, %v778
          %v795 = vand.u32 2147483647, %v779
          %v796 = vand.u32 2147483647, %v780
          %v797 = vand.u32 2147483647, %v781
          %v798 = vand.u32 2147483647, %v782
          %v799 = vand.u32 2147483647, %v783
          %v800 = vand.u32 2147483647, %v784
          %v801 = vand.u32 2147483647, %v785
          %v802 = vand.u32 2147483647, %v786
          %v803 = vand.u32 2147483647, %v787
          %v804 = vand.u32 2147483647, %v788
          %v805 = vand.u32 2147483647, %v789
          %v806 = vsub.f32 %v674, %v790
          %v807 = vsub.f32 %v675, %v791
          %v808 = vsub.f32 %v676, %v792
          %v809 = vsub.f32 %v677, %v793
          %v810 = vsub.f32 %v678, %v794
          %v811 = vsub.f32 %v679, %v795
          %v812 = vsub.f32 %v680, %v796
          %v813 = vsub.f32 %v681, %v797
          %v814 = vsub.f32 %v682, %v798
          %v815 = vsub.f32 %v683, %v799
          %v816 = vsub.f32 %v684, %v800
          %v817 = vsub.f32 %v685, %v801
          %v818 = vsub.f32 %v686, %v802
          %v819 = vsub.f32 %v687, %v803
          %v820 = vsub.f32 %v688, %v804
          %v821 = vsub.f32 %v689, %v805
          %822 = vset.pattern.permute.xlu0 1
          %823 = vperm.xlu0 %822, %v540
          %v824 = vpop.permute.xlu0 %823
          %826 = vset.pattern.permute.xlu0 1
          %827 = vperm.xlu0 %826, %v541
          %v828 = vpop.permute.xlu0 %827
          %830 = vset.pattern.permute.xlu0 1
          %831 = vperm.xlu0 %830, %v542
          %v832 = vpop.permute.xlu0 %831
          %834 = vset.pattern.permute.xlu0 1
          %835 = vperm.xlu0 %834, %v543
          %v836 = vpop.permute.xlu0 %835
          %838 = vset.pattern.permute.xlu0 1
          %839 = vperm.xlu0 %838, %v544
          %v840 = vpop.permute.xlu0 %839
          %842 = vset.pattern.permute.xlu0 1
          %843 = vperm.xlu0 %842, %v545
          %v844 = vpop.permute.xlu0 %843
          %846 = vset.pattern.permute.xlu0 1
          %847 = vperm.xlu0 %846, %v546
          %v848 = vpop.permute.xlu0 %847
          %850 = vset.pattern.permute.xlu0 1
          %851 = vperm.xlu0 %850, %v547
          %v852 = vpop.permute.xlu0 %851
          %854 = vset.pattern.permute.xlu0 1
          %855 = vperm.xlu0 %854, %v548
          %v856 = vpop.permute.xlu0 %855
          %858 = vset.pattern.permute.xlu0 1
          %859 = vperm.xlu0 %858, %v549
          %v860 = vpop.permute.xlu0 %859
          %862 = vset.pattern.permute.xlu0 1
          %863 = vperm.xlu0 %862, %v550
          %v864 = vpop.permute.xlu0 %863
          %866 = vset.pattern.permute.xlu0 1
          %867 = vperm.xlu0 %866, %v551
          %v868 = vpop.permute.xlu0 %867
          %870 = vset.pattern.permute.xlu0 1
          %871 = vperm.xlu0 %870, %v552
          %v872 = vpop.permute.xlu0 %871
          %874 = vset.pattern.permute.xlu0 1
          %875 = vperm.xlu0 %874, %v553
          %v876 = vpop.permute.xlu0 %875
          %878 = vset.pattern.permute.xlu0 1
          %879 = vperm.xlu0 %878, %v554
          %v880 = vpop.permute.xlu0 %879
          %882 = vset.pattern.permute.xlu0 1
          %883 = vperm.xlu0 %882, %v555
          %v884 = vpop.permute.xlu0 %883
          %v886 = vlaneseq
          %v887 = vshrl.u32 %v886, 7
          %v888 = vsub.s32 1, %v887
          %v889 = vrot.slane %v572, %v888
          %v890 = vsub.f32 %v824, %v889
          %v891 = vsub.f32 %v828, %v889
          %v892 = vsub.f32 %v832, %v889
          %v893 = vsub.f32 %v836, %v889
          %v894 = vsub.f32 %v840, %v889
          %v895 = vsub.f32 %v844, %v889
          %v896 = vsub.f32 %v848, %v889
          %v897 = vsub.f32 %v852, %v889
          %v898 = vsub.f32 %v856, %v889
          %v899 = vsub.f32 %v860, %v889
          %v900 = vsub.f32 %v864, %v889
          %v901 = vsub.f32 %v868, %v889
          %v902 = vsub.f32 %v872, %v889
          %v903 = vsub.f32 %v876, %v889
          %v904 = vsub.f32 %v880, %v889
          %v905 = vsub.f32 %v884, %v889
          %v906 = vand.u32 2147483647, %v890
          %v907 = vand.u32 2147483647, %v891
          %v908 = vand.u32 2147483647, %v892
          %v909 = vand.u32 2147483647, %v893
          %v910 = vand.u32 2147483647, %v894
          %v911 = vand.u32 2147483647, %v895
          %v912 = vand.u32 2147483647, %v896
          %v913 = vand.u32 2147483647, %v897
          %v914 = vand.u32 2147483647, %v898
          %v915 = vand.u32 2147483647, %v899
          %v916 = vand.u32 2147483647, %v900
          %v917 = vand.u32 2147483647, %v901
          %v918 = vand.u32 2147483647, %v902
          %v919 = vand.u32 2147483647, %v903
          %v920 = vand.u32 2147483647, %v904
          %v921 = vand.u32 2147483647, %v905
          %922 = vset.pattern.permute.xlu0 1
          %923 = vperm.xlu0 %922, %v556
          %v924 = vpop.permute.xlu0 %923
          %926 = vset.pattern.permute.xlu0 1
          %927 = vperm.xlu0 %926, %v557
          %v928 = vpop.permute.xlu0 %927
          %930 = vset.pattern.permute.xlu0 1
          %931 = vperm.xlu0 %930, %v558
          %v932 = vpop.permute.xlu0 %931
          %934 = vset.pattern.permute.xlu0 1
          %935 = vperm.xlu0 %934, %v559
          %v936 = vpop.permute.xlu0 %935
          %938 = vset.pattern.permute.xlu0 1
          %939 = vperm.xlu0 %938, %v560
          %v940 = vpop.permute.xlu0 %939
          %942 = vset.pattern.permute.xlu0 1
          %943 = vperm.xlu0 %942, %v561
          %v944 = vpop.permute.xlu0 %943
          %946 = vset.pattern.permute.xlu0 1
          %947 = vperm.xlu0 %946, %v562
          %v948 = vpop.permute.xlu0 %947
          %950 = vset.pattern.permute.xlu0 1
          %951 = vperm.xlu0 %950, %v563
          %v952 = vpop.permute.xlu0 %951
          %954 = vset.pattern.permute.xlu0 1
          %955 = vperm.xlu0 %954, %v564
          %v956 = vpop.permute.xlu0 %955
          %958 = vset.pattern.permute.xlu0 1
          %959 = vperm.xlu0 %958, %v565
          %v960 = vpop.permute.xlu0 %959
          %962 = vset.pattern.permute.xlu0 1
          %963 = vperm.xlu0 %962, %v566
          %v964 = vpop.permute.xlu0 %963
          %966 = vset.pattern.permute.xlu0 1
          %967 = vperm.xlu0 %966, %v567
          %v968 = vpop.permute.xlu0 %967
          %970 = vset.pattern.permute.xlu0 1
          %971 = vperm.xlu0 %970, %v568
          %v972 = vpop.permute.xlu0 %971
          %974 = vset.pattern.permute.xlu0 1
          %975 = vperm.xlu0 %974, %v569
          %v976 = vpop.permute.xlu0 %975
          %978 = vset.pattern.permute.xlu0 1
          %979 = vperm.xlu0 %978, %v570
          %v980 = vpop.permute.xlu0 %979
          %982 = vset.pattern.permute.xlu0 1
          %983 = vperm.xlu0 %982, %v571
          %v984 = vpop.permute.xlu0 %983
          %v986 = vlaneseq
          %v987 = vshrl.u32 %v986, 7
          %v988 = vsub.s32 1, %v987
          %v989 = vrot.slane %v573, %v988
          %v990 = vsub.f32 %v924, %v989
          %v991 = vsub.f32 %v928, %v989
          %v992 = vsub.f32 %v932, %v989
          %v993 = vsub.f32 %v936, %v989
          %v994 = vsub.f32 %v940, %v989
          %v995 = vsub.f32 %v944, %v989
          %v996 = vsub.f32 %v948, %v989
          %v997 = vsub.f32 %v952, %v989
          %v998 = vsub.f32 %v956, %v989
          %v999 = vsub.f32 %v960, %v989
          %v1000 = vsub.f32 %v964, %v989
          %v1001 = vsub.f32 %v968, %v989
          %v1002 = vsub.f32 %v972, %v989
          %v1003 = vsub.f32 %v976, %v989
          %v1004 = vsub.f32 %v980, %v989
          %v1005 = vsub.f32 %v984, %v989
          %v1006 = vand.u32 2147483647, %v990
          %v1007 = vand.u32 2147483647, %v991
          %v1008 = vand.u32 2147483647, %v992
          %v1009 = vand.u32 2147483647, %v993
          %v1010 = vand.u32 2147483647, %v994
          %v1011 = vand.u32 2147483647, %v995
          %v1012 = vand.u32 2147483647, %v996
          %v1013 = vand.u32 2147483647, %v997
          %v1014 = vand.u32 2147483647, %v998
          %v1015 = vand.u32 2147483647, %v999
          %v1016 = vand.u32 2147483647, %v1000
          %v1017 = vand.u32 2147483647, %v1001
          %v1018 = vand.u32 2147483647, %v1002
          %v1019 = vand.u32 2147483647, %v1003
          %v1020 = vand.u32 2147483647, %v1004
          %v1021 = vand.u32 2147483647, %v1005
          %v1022 = vsub.f32 %v906, %v1006
          %v1023 = vsub.f32 %v907, %v1007
          %v1024 = vsub.f32 %v908, %v1008
          %v1025 = vsub.f32 %v909, %v1009
          %v1026 = vsub.f32 %v910, %v1010
          %v1027 = vsub.f32 %v911, %v1011
          %v1028 = vsub.f32 %v912, %v1012
          %v1029 = vsub.f32 %v913, %v1013
          %v1030 = vsub.f32 %v914, %v1014
          %v1031 = vsub.f32 %v915, %v1015
          %v1032 = vsub.f32 %v916, %v1016
          %v1033 = vsub.f32 %v917, %v1017
          %v1034 = vsub.f32 %v918, %v1018
          %v1035 = vsub.f32 %v919, %v1019
          %v1036 = vsub.f32 %v920, %v1020
          %v1037 = vsub.f32 %v921, %v1021
          %v1038 = vadd.f32 %v806, %v1022
          %v1039 = vadd.f32 %v807, %v1023
          %v1040 = vadd.f32 %v808, %v1024
          %v1041 = vadd.f32 %v809, %v1025
          %v1042 = vadd.f32 %v810, %v1026
          %v1043 = vadd.f32 %v811, %v1027
          %v1044 = vadd.f32 %v812, %v1028
          %v1045 = vadd.f32 %v813, %v1029
          %v1046 = vadd.f32 %v814, %v1030
          %v1047 = vadd.f32 %v815, %v1031
          %v1048 = vadd.f32 %v816, %v1032
          %v1049 = vadd.f32 %v817, %v1033
          %v1050 = vadd.f32 %v818, %v1034
          %v1051 = vadd.f32 %v819, %v1035
          %v1052 = vadd.f32 %v820, %v1036
          %v1053 = vadd.f32 %v821, %v1037
          %1054 = vset.pattern.permute.xlu0 2
          %1055 = vperm.xlu0 %1054, %v540
          %v1056 = vpop.permute.xlu0 %1055
          %1058 = vset.pattern.permute.xlu0 2
          %1059 = vperm.xlu0 %1058, %v541
          %v1060 = vpop.permute.xlu0 %1059
          %1062 = vset.pattern.permute.xlu0 2
          %1063 = vperm.xlu0 %1062, %v542
          %v1064 = vpop.permute.xlu0 %1063
          %1066 = vset.pattern.permute.xlu0 2
          %1067 = vperm.xlu0 %1066, %v543
          %v1068 = vpop.permute.xlu0 %1067
          %1070 = vset.pattern.permute.xlu0 2
          %1071 = vperm.xlu0 %1070, %v544
          %v1072 = vpop.permute.xlu0 %1071
          %1074 = vset.pattern.permute.xlu0 2
          %1075 = vperm.xlu0 %1074, %v545
          %v1076 = vpop.permute.xlu0 %1075
          %1078 = vset.pattern.permute.xlu0 2
          %1079 = vperm.xlu0 %1078, %v546
          %v1080 = vpop.permute.xlu0 %1079
          %1082 = vset.pattern.permute.xlu0 2
          %1083 = vperm.xlu0 %1082, %v547
          %v1084 = vpop.permute.xlu0 %1083
          %1086 = vset.pattern.permute.xlu0 2
          %1087 = vperm.xlu0 %1086, %v548
          %v1088 = vpop.permute.xlu0 %1087
          %1090 = vset.pattern.permute.xlu0 2
          %1091 = vperm.xlu0 %1090, %v549
          %v1092 = vpop.permute.xlu0 %1091
          %1094 = vset.pattern.permute.xlu0 2
          %1095 = vperm.xlu0 %1094, %v550
          %v1096 = vpop.permute.xlu0 %1095
          %1098 = vset.pattern.permute.xlu0 2
          %1099 = vperm.xlu0 %1098, %v551
          %v1100 = vpop.permute.xlu0 %1099
          %1102 = vset.pattern.permute.xlu0 2
          %1103 = vperm.xlu0 %1102, %v552
          %v1104 = vpop.permute.xlu0 %1103
          %1106 = vset.pattern.permute.xlu0 2
          %1107 = vperm.xlu0 %1106, %v553
          %v1108 = vpop.permute.xlu0 %1107
          %1110 = vset.pattern.permute.xlu0 2
          %1111 = vperm.xlu0 %1110, %v554
          %v1112 = vpop.permute.xlu0 %1111
          %1114 = vset.pattern.permute.xlu0 2
          %1115 = vperm.xlu0 %1114, %v555
          %v1116 = vpop.permute.xlu0 %1115
          %v1118 = vlaneseq
          %v1119 = vshrl.u32 %v1118, 7
          %v1120 = vsub.s32 2, %v1119
          %v1121 = vrot.slane %v572, %v1120
          %v1122 = vsub.f32 %v1056, %v1121
          %v1123 = vsub.f32 %v1060, %v1121
          %v1124 = vsub.f32 %v1064, %v1121
          %v1125 = vsub.f32 %v1068, %v1121
          %v1126 = vsub.f32 %v1072, %v1121
          %v1127 = vsub.f32 %v1076, %v1121
          %v1128 = vsub.f32 %v1080, %v1121
          %v1129 = vsub.f32 %v1084, %v1121
          %v1130 = vsub.f32 %v1088, %v1121
          %v1131 = vsub.f32 %v1092, %v1121
          %v1132 = vsub.f32 %v1096, %v1121
          %v1133 = vsub.f32 %v1100, %v1121
          %v1134 = vsub.f32 %v1104, %v1121
          %v1135 = vsub.f32 %v1108, %v1121
          %v1136 = vsub.f32 %v1112, %v1121
          %v1137 = vsub.f32 %v1116, %v1121
          %v1138 = vand.u32 2147483647, %v1122
          %v1139 = vand.u32 2147483647, %v1123
          %v1140 = vand.u32 2147483647, %v1124
          %v1141 = vand.u32 2147483647, %v1125
          %v1142 = vand.u32 2147483647, %v1126
          %v1143 = vand.u32 2147483647, %v1127
          %v1144 = vand.u32 2147483647, %v1128
          %v1145 = vand.u32 2147483647, %v1129
          %v1146 = vand.u32 2147483647, %v1130
          %v1147 = vand.u32 2147483647, %v1131
          %v1148 = vand.u32 2147483647, %v1132
          %v1149 = vand.u32 2147483647, %v1133
          %v1150 = vand.u32 2147483647, %v1134
          %v1151 = vand.u32 2147483647, %v1135
          %v1152 = vand.u32 2147483647, %v1136
          %v1153 = vand.u32 2147483647, %v1137
          %1154 = vset.pattern.permute.xlu0 2
          %1155 = vperm.xlu0 %1154, %v556
          %v1156 = vpop.permute.xlu0 %1155
          %1158 = vset.pattern.permute.xlu0 2
          %1159 = vperm.xlu0 %1158, %v557
          %v1160 = vpop.permute.xlu0 %1159
          %1162 = vset.pattern.permute.xlu0 2
          %1163 = vperm.xlu0 %1162, %v558
          %v1164 = vpop.permute.xlu0 %1163
          %1166 = vset.pattern.permute.xlu0 2
          %1167 = vperm.xlu0 %1166, %v559
          %v1168 = vpop.permute.xlu0 %1167
          %1170 = vset.pattern.permute.xlu0 2
          %1171 = vperm.xlu0 %1170, %v560
          %v1172 = vpop.permute.xlu0 %1171
          %1174 = vset.pattern.permute.xlu0 2
          %1175 = vperm.xlu0 %1174, %v561
          %v1176 = vpop.permute.xlu0 %1175
          %1178 = vset.pattern.permute.xlu0 2
          %1179 = vperm.xlu0 %1178, %v562
          %v1180 = vpop.permute.xlu0 %1179
          %1182 = vset.pattern.permute.xlu0 2
          %1183 = vperm.xlu0 %1182, %v563
          %v1184 = vpop.permute.xlu0 %1183
          %1186 = vset.pattern.permute.xlu0 2
          %1187 = vperm.xlu0 %1186, %v564
          %v1188 = vpop.permute.xlu0 %1187
          %1190 = vset.pattern.permute.xlu0 2
          %1191 = vperm.xlu0 %1190, %v565
          %v1192 = vpop.permute.xlu0 %1191
          %1194 = vset.pattern.permute.xlu0 2
          %1195 = vperm.xlu0 %1194, %v566
          %v1196 = vpop.permute.xlu0 %1195
          %1198 = vset.pattern.permute.xlu0 2
          %1199 = vperm.xlu0 %1198, %v567
          %v1200 = vpop.permute.xlu0 %1199
          %1202 = vset.pattern.permute.xlu0 2
          %1203 = vperm.xlu0 %1202, %v568
          %v1204 = vpop.permute.xlu0 %1203
          %1206 = vset.pattern.permute.xlu0 2
          %1207 = vperm.xlu0 %1206, %v569
          %v1208 = vpop.permute.xlu0 %1207
          %1210 = vset.pattern.permute.xlu0 2
          %1211 = vperm.xlu0 %1210, %v570
          %v1212 = vpop.permute.xlu0 %1211
          %1214 = vset.pattern.permute.xlu0 2
          %1215 = vperm.xlu0 %1214, %v571
          %v1216 = vpop.permute.xlu0 %1215
          %v1218 = vlaneseq
          %v1219 = vshrl.u32 %v1218, 7
          %v1220 = vsub.s32 2, %v1219
          %v1221 = vrot.slane %v573, %v1220
          %v1222 = vsub.f32 %v1156, %v1221
          %v1223 = vsub.f32 %v1160, %v1221
          %v1224 = vsub.f32 %v1164, %v1221
          %v1225 = vsub.f32 %v1168, %v1221
          %v1226 = vsub.f32 %v1172, %v1221
          %v1227 = vsub.f32 %v1176, %v1221
          %v1228 = vsub.f32 %v1180, %v1221
          %v1229 = vsub.f32 %v1184, %v1221
          %v1230 = vsub.f32 %v1188, %v1221
          %v1231 = vsub.f32 %v1192, %v1221
          %v1232 = vsub.f32 %v1196, %v1221
          %v1233 = vsub.f32 %v1200, %v1221
          %v1234 = vsub.f32 %v1204, %v1221
          %v1235 = vsub.f32 %v1208, %v1221
          %v1236 = vsub.f32 %v1212, %v1221
          %v1237 = vsub.f32 %v1216, %v1221
          %v1238 = vand.u32 2147483647, %v1222
          %v1239 = vand.u32 2147483647, %v1223
          %v1240 = vand.u32 2147483647, %v1224
          %v1241 = vand.u32 2147483647, %v1225
          %v1242 = vand.u32 2147483647, %v1226
          %v1243 = vand.u32 2147483647, %v1227
          %v1244 = vand.u32 2147483647, %v1228
          %v1245 = vand.u32 2147483647, %v1229
          %v1246 = vand.u32 2147483647, %v1230
          %v1247 = vand.u32 2147483647, %v1231
          %v1248 = vand.u32 2147483647, %v1232
          %v1249 = vand.u32 2147483647, %v1233
          %v1250 = vand.u32 2147483647, %v1234
          %v1251 = vand.u32 2147483647, %v1235
          %v1252 = vand.u32 2147483647, %v1236
          %v1253 = vand.u32 2147483647, %v1237
          %v1254 = vsub.f32 %v1138, %v1238
          %v1255 = vsub.f32 %v1139, %v1239
          %v1256 = vsub.f32 %v1140, %v1240
          %v1257 = vsub.f32 %v1141, %v1241
          %v1258 = vsub.f32 %v1142, %v1242
          %v1259 = vsub.f32 %v1143, %v1243
          %v1260 = vsub.f32 %v1144, %v1244
          %v1261 = vsub.f32 %v1145, %v1245
          %v1262 = vsub.f32 %v1146, %v1246
          %v1263 = vsub.f32 %v1147, %v1247
          %v1264 = vsub.f32 %v1148, %v1248
          %v1265 = vsub.f32 %v1149, %v1249
          %v1266 = vsub.f32 %v1150, %v1250
          %v1267 = vsub.f32 %v1151, %v1251
          %v1268 = vsub.f32 %v1152, %v1252
          %v1269 = vsub.f32 %v1153, %v1253
          %v1270 = vadd.f32 %v1038, %v1254
          %v1271 = vadd.f32 %v1039, %v1255
          %v1272 = vadd.f32 %v1040, %v1256
          %v1273 = vadd.f32 %v1041, %v1257
          %v1274 = vadd.f32 %v1042, %v1258
          %v1275 = vadd.f32 %v1043, %v1259
          %v1276 = vadd.f32 %v1044, %v1260
          %v1277 = vadd.f32 %v1045, %v1261
          %v1278 = vadd.f32 %v1046, %v1262
          %v1279 = vadd.f32 %v1047, %v1263
          %v1280 = vadd.f32 %v1048, %v1264
          %v1281 = vadd.f32 %v1049, %v1265
          %v1282 = vadd.f32 %v1050, %v1266
          %v1283 = vadd.f32 %v1051, %v1267
          %v1284 = vadd.f32 %v1052, %v1268
          %v1285 = vadd.f32 %v1053, %v1269
          %v1286 = vand.u32 2147483647, %v1270
          %v1287 = vand.u32 2147483647, %v1271
          %v1288 = vand.u32 2147483647, %v1272
          %v1289 = vand.u32 2147483647, %v1273
          %v1290 = vand.u32 2147483647, %v1274
          %v1291 = vand.u32 2147483647, %v1275
          %v1292 = vand.u32 2147483647, %v1276
          %v1293 = vand.u32 2147483647, %v1277
          %v1294 = vand.u32 2147483647, %v1278
          %v1295 = vand.u32 2147483647, %v1279
          %v1296 = vand.u32 2147483647, %v1280
          %v1297 = vand.u32 2147483647, %v1281
          %v1298 = vand.u32 2147483647, %v1282
          %v1299 = vand.u32 2147483647, %v1283
          %v1300 = vand.u32 2147483647, %v1284
          %v1301 = vand.u32 2147483647, %v1285
          %v1302 = vld [vmem:[%s511] sm:$0xf]
          %v1303 = vld [vmem:[%s511 + $0x4] sm:$0xf]
          %v1304 = vld [vmem:[%s511 + $0x8] sm:$0xf]
          %v1305 = vld [vmem:[%s511 + $0xc] sm:$0xf]
          %v1306 = vld [vmem:[%s511 + $0x10] sm:$0xf]
          %v1307 = vld [vmem:[%s511 + $0x14] sm:$0xf]
          %v1308 = vld [vmem:[%s511 + $0x18] sm:$0xf]
          %v1309 = vld [vmem:[%s511 + $0x1c] sm:$0xf]
          %v1310 = vld [vmem:[%s511 + $0x20] sm:$0xf]
          %v1311 = vld [vmem:[%s511 + $0x24] sm:$0xf]
          %v1312 = vld [vmem:[%s511 + $0x28] sm:$0xf]
          %v1313 = vld [vmem:[%s511 + $0x2c] sm:$0xf]
          %v1314 = vld [vmem:[%s511 + $0x30] sm:$0xf]
          %v1315 = vld [vmem:[%s511 + $0x34] sm:$0xf]
          %v1316 = vld [vmem:[%s511 + $0x38] sm:$0xf]
          %v1317 = vld [vmem:[%s511 + $0x3c] sm:$0xf]
          %v1318 = vld [vmem:[%s522] sm:$0xf]
          %v1335 = vunpack.c.l.b16 %v1302
          %v1336 = vunpack.c.l.b16 %v1303
          %v1337 = vunpack.c.l.b16 %v1304
          %v1338 = vunpack.c.l.b16 %v1305
          %v1339 = vunpack.c.l.b16 %v1306
          %v1340 = vunpack.c.l.b16 %v1307
          %v1341 = vunpack.c.l.b16 %v1308
          %v1342 = vunpack.c.l.b16 %v1309
          %v1343 = vunpack.c.l.b16 %v1310
          %v1344 = vunpack.c.l.b16 %v1311
          %v1345 = vunpack.c.l.b16 %v1312
          %v1346 = vunpack.c.l.b16 %v1313
          %v1347 = vunpack.c.l.b16 %v1314
          %v1348 = vunpack.c.l.b16 %v1315
          %v1349 = vunpack.c.l.b16 %v1316
          %v1350 = vunpack.c.l.b16 %v1317
          %v1351 = vpack.c.b16 %v1336, %v1335
          %v1352 = vpack.c.b16 %v1338, %v1337
          %v1353 = vpack.c.b16 %v1340, %v1339
          %v1354 = vpack.c.b16 %v1342, %v1341
          %v1355 = vpack.c.b16 %v1344, %v1343
          %v1356 = vpack.c.b16 %v1346, %v1345
          %v1357 = vpack.c.b16 %v1348, %v1347
          %v1358 = vpack.c.b16 %v1350, %v1349
          %vm1359 = vcmask 64512
          %v1361 = vsel %vm1359, %v1351, 0
          %v1364 = vsel %vm1359, %v1352, 0
          %v1367 = vsel %vm1359, %v1353, 0
          %v1370 = vsel %vm1359, %v1354, 0
          %v1373 = vsel %vm1359, %v1355, 0
          %v1376 = vsel %vm1359, %v1356, 0
          %v1379 = vsel %vm1359, %v1357, 0
          %v1382 = vsel %vm1359, %v1358, 0
          %vm1384 = vcmask 1043456
          %v1386 = vsel %vm1384, %v1318, 0
          %1388 = vmatprep.subr.bf16.mxu0 0
          %1389 = vmatpush1.bf16.msra.mxu0 %v1386
          %1390 = vmatprep.subr.bf16.mxu0 0
          %1391 = vmatpush1.bf16.msra.mxu0 0
          %1392 = vmatprep.subr.bf16.mxu0 0
          %1393 = vmatpush1.bf16.msra.mxu0 0
          %1394 = vmatprep.subr.bf16.mxu0 0
          %1395 = vmatpush1.bf16.msra.mxu0 0
          %1396 = vmatprep.subr.bf16.mxu0 0
          %1397 = vmatpush1.bf16.msra.mxu0 0
          %1398 = vmatprep.subr.bf16.mxu0 0
          %1399 = vmatpush1.bf16.msra.mxu0 0
          %1400 = vmatprep.subr.bf16.mxu0 0
          %1401 = vmatpush1.bf16.msra.mxu0 0
          %1402 = vmatprep.subr.bf16.mxu0 0
          %1403 = vmatpush1.bf16.msra.mxu0 0
          %1404 = vmatprep.subr.bf16.mxu0 0
          %1405 = vmatpush1.bf16.msra.mxu0 0
          %1406 = vmatprep.subr.bf16.mxu0 0
          %1407 = vmatpush1.bf16.msra.mxu0 0
          %1408 = vmatprep.subr.bf16.mxu0 0
          %1409 = vmatpush1.bf16.msra.mxu0 0
          %1410 = vmatprep.subr.bf16.mxu0 0
          %1411 = vmatpush1.bf16.msra.mxu0 0
          %1412 = vmatprep.subr.bf16.mxu0 0
          %1413 = vmatpush1.bf16.msra.mxu0 0
          %1414 = vmatprep.subr.bf16.mxu0 0
          %1415 = vmatpush1.bf16.msra.mxu0 0
          %1416 = vmatprep.subr.bf16.mxu0 0
          %1417 = vmatpush1.bf16.msra.mxu0 0
          %1418 = vmatprep.subr.bf16.mxu0 0
          %1419 = vmatpush1.bf16.msra.mxu0 0
          %1420 = vmatprep.mubr.bf16.mxu0 0
          %1421 = vmatmul.mubr.bf16.gmra.mrb[0].mxu0 %v1361
          %v1422 = vpop.f32.mrb[0].mxu0
          %v1423 = vadd.f32 0.0, %v1422
          %v1424 = vpop.f32.mrb[0].mxu0
          %v1425 = vpop.f32.mrb[0].mxu0
          %v1426 = vadd.f32 0.0, %v1425
          %v1427 = vpop.f32.mrb[0].mxu0
          %1428 = vmatprep.mubr.bf16.mxu0 0
          %1429 = vmatmul.mubr.bf16.gmra.mrb[0].mxu0 %v1364
          %v1430 = vpop.f32.mrb[0].mxu0
          %v1431 = vadd.f32 0.0, %v1430
          %v1432 = vpop.f32.mrb[0].mxu0
          %v1433 = vpop.f32.mrb[0].mxu0
          %v1434 = vadd.f32 0.0, %v1433
          %v1435 = vpop.f32.mrb[0].mxu0
          %1436 = vmatprep.mubr.bf16.mxu0 0
          %1437 = vmatmul.mubr.bf16.gmra.mrb[0].mxu0 %v1367
          %v1438 = vpop.f32.mrb[0].mxu0
          %v1439 = vadd.f32 0.0, %v1438
          %v1440 = vpop.f32.mrb[0].mxu0
          %v1441 = vpop.f32.mrb[0].mxu0
          %v1442 = vadd.f32 0.0, %v1441
          %v1443 = vpop.f32.mrb[0].mxu0
          %1444 = vmatprep.mubr.bf16.mxu0 0
          %1445 = vmatmul.mubr.bf16.gmra.mrb[0].mxu0 %v1370
          %v1446 = vpop.f32.mrb[0].mxu0
          %v1447 = vadd.f32 0.0, %v1446
          %v1448 = vpop.f32.mrb[0].mxu0
          %v1449 = vpop.f32.mrb[0].mxu0
          %v1450 = vadd.f32 0.0, %v1449
          %v1451 = vpop.f32.mrb[0].mxu0
          %1452 = vmatprep.mubr.bf16.mxu0 0
          %1453 = vmatmul.mubr.bf16.gmra.mrb[0].mxu0 %v1373
          %v1454 = vpop.f32.mrb[0].mxu0
          %v1455 = vadd.f32 0.0, %v1454
          %v1456 = vpop.f32.mrb[0].mxu0
          %v1457 = vpop.f32.mrb[0].mxu0
          %v1458 = vadd.f32 0.0, %v1457
          %v1459 = vpop.f32.mrb[0].mxu0
          %1460 = vmatprep.mubr.bf16.mxu0 0
          %1461 = vmatmul.mubr.bf16.gmra.mrb[0].mxu0 %v1376
          %v1462 = vpop.f32.mrb[0].mxu0
          %v1463 = vadd.f32 0.0, %v1462
          %v1464 = vpop.f32.mrb[0].mxu0
          %v1465 = vpop.f32.mrb[0].mxu0
          %v1466 = vadd.f32 0.0, %v1465
          %v1467 = vpop.f32.mrb[0].mxu0
          %1468 = vmatprep.mubr.bf16.mxu0 0
          %1469 = vmatmul.mubr.bf16.gmra.mrb[0].mxu0 %v1379
          %v1470 = vpop.f32.mrb[0].mxu0
          %v1471 = vadd.f32 0.0, %v1470
          %v1472 = vpop.f32.mrb[0].mxu0
          %v1473 = vpop.f32.mrb[0].mxu0
          %v1474 = vadd.f32 0.0, %v1473
          %v1475 = vpop.f32.mrb[0].mxu0
          %1476 = vmatprep.mubr.bf16.mxu0 0
          %1477 = vmatmul.mubr.bf16.gmra.mrb[0].mxu0 %v1382
          %v1478 = vpop.f32.mrb[0].mxu0
          %v1479 = vadd.f32 0.0, %v1478
          %v1480 = vpop.f32.mrb[0].mxu0
          %v1481 = vpop.f32.mrb[0].mxu0
          %v1482 = vadd.f32 0.0, %v1481
          %v1483 = vpop.f32.mrb[0].mxu0
          %1484 = vdwg.mxu0
          %vm1485 = vcmp.lt.f32.partialorder %v1286, 3.0
          %vm1486 = vcmp.lt.f32.partialorder %v1287, 3.0
          %vm1487 = vcmp.lt.f32.partialorder %v1288, 3.0
          %vm1488 = vcmp.lt.f32.partialorder %v1289, 3.0
          %vm1489 = vcmp.lt.f32.partialorder %v1290, 3.0
          %vm1490 = vcmp.lt.f32.partialorder %v1291, 3.0
          %vm1491 = vcmp.lt.f32.partialorder %v1292, 3.0
          %vm1492 = vcmp.lt.f32.partialorder %v1293, 3.0
          %vm1493 = vcmp.lt.f32.partialorder %v1294, 3.0
          %vm1494 = vcmp.lt.f32.partialorder %v1295, 3.0
          %vm1495 = vcmp.lt.f32.partialorder %v1296, 3.0
          %vm1496 = vcmp.lt.f32.partialorder %v1297, 3.0
          %vm1497 = vcmp.lt.f32.partialorder %v1298, 3.0
          %vm1498 = vcmp.lt.f32.partialorder %v1299, 3.0
          %vm1499 = vcmp.lt.f32.partialorder %v1300, 3.0
          %vm1500 = vcmp.lt.f32.partialorder %v1301, 3.0
          %v1501 = vsel %vm1485, %v1423, 0.0
          %v1502 = vsel %vm1486, %v1426, 0.0
          %v1503 = vsel %vm1487, %v1431, 0.0
          %v1504 = vsel %vm1488, %v1434, 0.0
          %v1505 = vsel %vm1489, %v1439, 0.0
          %v1506 = vsel %vm1490, %v1442, 0.0
          %v1507 = vsel %vm1491, %v1447, 0.0
          %v1508 = vsel %vm1492, %v1450, 0.0
          %v1509 = vsel %vm1493, %v1455, 0.0
          %v1510 = vsel %vm1494, %v1458, 0.0
          %v1511 = vsel %vm1495, %v1463, 0.0
          %v1512 = vsel %vm1496, %v1466, 0.0
          %v1513 = vsel %vm1497, %v1471, 0.0
          %v1514 = vsel %vm1498, %v1474, 0.0
          %v1515 = vsel %vm1499, %v1479, 0.0
          %v1516 = vsel %vm1500, %v1482, 0.0
          %v1517 = vmul.f32 %v1501, %v1286
          %v1518 = vmul.f32 %v1502, %v1287
          %v1519 = vmul.f32 %v1503, %v1288
          %v1520 = vmul.f32 %v1504, %v1289
          %v1521 = vmul.f32 %v1505, %v1290
          %v1522 = vmul.f32 %v1506, %v1291
          %v1523 = vmul.f32 %v1507, %v1292
          %v1524 = vmul.f32 %v1508, %v1293
          %v1525 = vmul.f32 %v1509, %v1294
          %v1526 = vmul.f32 %v1510, %v1295
          %v1527 = vmul.f32 %v1511, %v1296
          %v1528 = vmul.f32 %v1512, %v1297
          %v1529 = vmul.f32 %v1513, %v1298
          %v1530 = vmul.f32 %v1514, %v1299
          %v1531 = vmul.f32 %v1515, %v1300
          %v1532 = vmul.f32 %v1516, %v1301
          %s1533 = scvt.s32.f32 %s535
          %v1534 = vld [vmem:[#allocation6] sm:$0xff]
          %v1535 = vadd.f32 %v1517, %v1518
          %v1536 = vadd.f32 %v1535, %v1519
          %v1537 = vadd.f32 %v1536, %v1520
          %v1538 = vadd.f32 %v1537, %v1521
          %v1539 = vadd.f32 %v1538, %v1522
          %v1540 = vadd.f32 %v1539, %v1523
          %v1541 = vadd.f32 %v1540, %v1524
          %v1542 = vadd.f32 %v1541, %v1525
          %v1543 = vadd.f32 %v1542, %v1526
          %v1544 = vadd.f32 %v1543, %v1527
          %v1545 = vadd.f32 %v1544, %v1528
          %v1546 = vadd.f32 %v1545, %v1529
          %v1547 = vadd.f32 %v1546, %v1530
          %v1548 = vadd.f32 %v1547, %v1531
          %v1549 = vadd.f32 %v1548, %v1532
          %v1550 = vstv %s1533
          %v1551 = vmul.f32 %v1550, %v1549
          %v1552 = vadd.f32 %v1534, %v1551
          %1553 = vst [vmem:[#allocation6] sm:$0xff] %v1552
          %v1554 = vld [vmem:[#allocation8] sm:$0xff]
          %v1555 = vadd.f32 %v1501, %v1502
          %v1556 = vadd.f32 %v1555, %v1503
          %v1557 = vadd.f32 %v1556, %v1504
          %v1558 = vadd.f32 %v1557, %v1505
          %v1559 = vadd.f32 %v1558, %v1506
          %v1560 = vadd.f32 %v1559, %v1507
          %v1561 = vadd.f32 %v1560, %v1508
          %v1562 = vadd.f32 %v1561, %v1509
          %v1563 = vadd.f32 %v1562, %v1510
          %v1564 = vadd.f32 %v1563, %v1511
          %v1565 = vadd.f32 %v1564, %v1512
          %v1566 = vadd.f32 %v1565, %v1513
          %v1567 = vadd.f32 %v1566, %v1514
          %v1568 = vadd.f32 %v1567, %v1515
          %v1569 = vadd.f32 %v1568, %v1516
          %v1570 = vmul.f32 %v1550, %v1569
          %v1571 = vadd.f32 %v1554, %v1570
          %1572 = vst [vmem:[#allocation8] sm:$0xff] %v1571
        $region52: #{tpu_custom_call.1} parent=43 // pred_fallthru
          _
        // Predicated region
        $region53: #{tpu_custom_call.1} parent=43 // pred_check
          %p1573 = pneg %p260
        $region54: #{tpu_custom_call.1} parent=43 // pred_check_branch
          %1575 = sbr.rel (%p1573) target = $region56
        $region55: #{tpu_custom_call.1} parent=43 // pred_region
          %s1577 = ssub.s32 128, 128
          %1578 = vsyncadd [#allocation7], %s1577
          %s1579 = smul.addr %s42, 128
          %s1580 = scalar_lea.hbm %s9, %s1579
          %s1582 = sshll.u32 [#allocation6], 4
          %s1583 = int_to_ptr.vmem [resolvable:$true] %s1582
          %1585 = dma.vmem_to_hbm [thread:$0]  %s1583, 128, %s1580, [#allocation7]
        $region56: #{tpu_custom_call.1} parent=43 // pred_fallthru
          _
        // Predicated region
        $region57: #{tpu_custom_call.1} parent=43 // pred_check
          %p1586 = pneg %p286
        $region58: #{tpu_custom_call.1} parent=43 // pred_check_branch
          %1588 = sbr.rel (%p1586) target = $region60
        $region59: #{tpu_custom_call.1} parent=43 // pred_region
          %s1590 = ssub.s32 128, 128
          %1591 = vsyncadd [#allocation9], %s1590
          %s1592 = smul.addr %s42, 128
          %s1593 = scalar_lea.hbm %s10, %s1592
          %s1595 = sshll.u32 [#allocation8], 4
          %s1596 = int_to_ptr.vmem [resolvable:$true] %s1595
          %1598 = dma.vmem_to_hbm [thread:$0]  %s1596, 128, %s1593, [#allocation9]
        $region60: #{tpu_custom_call.1} parent=43 // pred_fallthru
          _
        // Predicated region
        $region61: #{tpu_custom_call.1} parent=43 // pred_check
          %p1599 = pneg %p260
        $region62: #{tpu_custom_call.1} parent=43 // pred_check_branch
          %1601 = sbr.rel (%p1599) target = $region64
        $region63: #{tpu_custom_call.1} parent=43 // pred_region
          %1602 = dma.done [#allocation7], 128
        $region64: #{tpu_custom_call.1} parent=43 // pred_fallthru
          _
        // Predicated region
        $region65: #{tpu_custom_call.1} parent=43 // pred_check
          %p1603 = pneg %p286
        $region66: #{tpu_custom_call.1} parent=43 // pred_check_branch
          %1605 = sbr.rel (%p1603) target = $region68
        $region67: #{tpu_custom_call.1} parent=43 // pred_region
          %1606 = dma.done [#allocation9], 128
        $region68: #{tpu_custom_call.1} parent=43 // pred_fallthru
          _
      $region44: #{tpu_custom_call.1} parent=5 // pred_fallthru
        _
      %p1607 = scmp.le.s32.totalorder 2, %s33
      // Predicated region
      $region69: #{tpu_custom_call.1} parent=5 // pred_check
        %p1608 = pneg %p1607
      $region70: #{tpu_custom_call.1} parent=5 // pred_check_branch
        %1610 = sbr.rel (%p1608) target = $region72
      $region71: #{tpu_custom_call.1} parent=5 // pred_region
        %s1611 = ssub.s32 %s33, 2
      $region72: #{tpu_custom_call.1} parent=5 // pred_fallthru
        _
    $region6: #{tpu_custom_call.1} parent=1 // loop_footer
      %s37 = sadd.s32 1, %s33
    $region7: #{tpu_custom_call.1} parent=1 // loop_footer_branch
      %32 = sbr.rel target = $region3
    $region8: #{tpu_custom_call.1} parent=1 // loop_exit
      _
    %1612 = vsyncpa [#allocation7], 1
    %s1613 = scalar_lea.sflag [#allocation7], 1
    %1614 = vsyncpa %s1613, 1
    %1615 = vsyncpa [#allocation9], 1

</llo_original>
